<compile_context>
chip_gen: v7x
topology: tpu7x:2x2x1
jax: 0.10.0
libtpu: 0.0.40
codegen_flags: <defaults>
</compile_context>

<pallas_src>
import functools

import jax
import jax.numpy as jnp
from jax.experimental import pallas as pl
from jax.experimental.pallas import tpu as pltpu


def _round_up(x, m):
    return (x + m - 1) // m * m


def _vmem_limit_bytes():
    """Generation-aware scoped-VMEM request with headroom (v7x: 64 MiB/TC)."""
    cap = None
    try:
        info = pltpu.get_tpu_info()
        cap = int(getattr(info, "vmem_capacity_bytes", 0)) or None
    except Exception:
        cap = None
    if cap is None:
        cap = 64 * 1024 * 1024          # conservative (v7x-sized) fallback
    return int(min(64 * 1024 * 1024, (cap * 3) // 4))


def _focal_loss_kernel(*refs, alpha, gamma, ignore_index, k, m_rows):
    if k > 1:
        within_ref, s_ref, r_ref, x_ref, t_ref, sum_ref, cnt_ref = refs
    else:
        x_ref, t_ref, sum_ref, cnt_ref = refs

    p = pl.program_id(0)          # megacore split axis ("parallel")
    i = pl.program_id(1)          # row-tile axis       ("arbitrary")

    # Tiny (1,1) per-core output blocks are resident accumulators.
    @pl.when(i == 0)
    def _():
        sum_ref[...] = jnp.zeros_like(sum_ref)
        cnt_ref[...] = jnp.zeros_like(cnt_ref)

    x = x_ref[...].astype(jnp.float32)        # (tile_m, k*C)  lane-dense
    t = t_ref[...]                            # (tile_m, k)    int32
    tile_m = x.shape[0]

    # Shared stabilizer: max over the whole packed row is >= every segment's
    # max, so exp(x - m) never overflows and the per-segment logsumexp below
    # is mathematically exact.
    m = jnp.max(x, axis=-1, keepdims=True)                       # (tile_m, 1)
    e = jnp.exp(x - m)                                           # (tile_m, k*C)

    if k > 1:
        hi = jax.lax.Precision.HIGHEST
        s_mat = s_ref[...]                    # (k*C, k) segment-sum one-hot
        r_mat = r_ref[...]                    # (k, k*C) segment-expand one-hot
        within = within_ref[...]              # (1, k*C) class idx within segment (f32)

        # Per-segment sum of exp via a small MXU matmul (MXU is otherwise idle).
        sum_exp = jnp.dot(e, s_mat, preferred_element_type=jnp.float32,
                          precision=hi)                          # (tile_m, k)
        # Expand per-segment targets across their C lanes (exact small ints),
        # then gather the target logit with a one-hot select + segment matmul.
        t_exp = jnp.dot(t.astype(jnp.float32), r_mat,
                        preferred_element_type=jnp.float32,
                        precision=hi)                            # (tile_m, k*C)
        x_sel = jnp.where(t_exp == within, x, 0.0)
        x_t = jnp.dot(x_sel, s_mat, preferred_element_type=jnp.float32,
                      precision=hi)                              # (tile_m, k)
    else:
        cols = jax.lax.broadcasted_iota(jnp.int32, x.shape, 1)
        sum_exp = jnp.sum(e, axis=-1, keepdims=True)             # (tile_m, 1)
        x_t = jnp.sum(jnp.where(cols == t, x, 0.0),
                      axis=-1, keepdims=True)                    # (tile_m, 1)

    log_pt = x_t - (m + jnp.log(sum_exp))     # log p_target     (tile_m, k)
    p_t = jnp.exp(log_pt)                     # one exp per (row, segment)
    one_m = 1.0 - p_t
    if gamma == 2:                            # default: VALU square, no pow
        w = one_m * one_m
    elif float(gamma) == int(gamma) and gamma >= 0:
        w = jax.lax.integer_pow(one_m, int(gamma))
    else:
        w = jnp.power(one_m, gamma)
    per = (alpha * w) * log_pt                # alpha*(1-p)^g * log p

    # Validity: not ignore_index, and the *logical* tile (before the clamp in
    # the index map) must lie inside the real packed rows -> duplicate /
    # overhanging tiles contribute exactly zero.
    logical_tile = i * pl.num_programs(0) + p
    row_ids = logical_tile * tile_m + jax.lax.broadcasted_iota(
        jnp.int32, t.shape, 0)
    valid = (t != ignore_index) & (row_ids < m_rows)

    loss_c = jnp.where(valid, -per, 0.0)
    cnt_c = valid.astype(jnp.float32)

    # Per-tile reduction to two scalars; only a single tiny (1,1) VMEM
    # accumulator update per step (no lane-sparse streaming stores).
    sum_ref[...] += jnp.sum(jnp.sum(loss_c, axis=0, keepdims=True),
                            axis=1, keepdims=True)
    cnt_ref[...] += jnp.sum(jnp.sum(cnt_c, axis=0, keepdims=True),
                            axis=1, keepdims=True)


def focal_loss_with_logits(inputs, targets, *, alpha=1.0, gamma=2.0,
                           ignore_index=-1, block_bytes=4 * 1024 * 1024,
                           tile_rows=None):
    """inputs: (N, C) float logits (f32 or bf16); targets: (N,) int classes."""
    n, c = inputs.shape
    targets = targets.astype(jnp.int32)
    itemsize = jnp.dtype(inputs.dtype).itemsize

    # Lane packing factor: k rows per 128-lane row (k == 1 for C > 64).
    k = max(1, 128 // int(c))
    kc = k * c

    # Packed-row count; keep at least 8 rows so every block / matmul shape is
    # well formed.  Padding only copies when N is not already a multiple of k
    # (tiny inputs) - padded rows carry ignore_index and contribute nothing.
    m_rows = max(-(-n // k), 8)
    n_tot = m_rows * k
    if n_tot != n:
        inputs = jnp.pad(inputs, ((0, n_tot - n), (0, 0)))
        targets = jnp.pad(targets, (0, n_tot - n),
                          constant_values=jnp.int32(ignore_index))
    x_packed = inputs.reshape(m_rows, kc)
    t_packed = targets.reshape(m_rows, k)

    # Row-tile size: ~block_bytes of logits per block, NO row cap; multiple of
    # 32 rows (covers f32/bf16/int8 sublane packing), capped at m_rows.
    if tile_rows is None:
        tile_m = int(block_bytes) // max(kc * itemsize, 1)
        tile_m = max(32, (tile_m // 32) * 32)
    else:
        tile_m = max(8, (int(tile_rows) // 8) * 8)
    tile_m = min(tile_m, m_rows)

    tiles = -(-m_rows // tile_m)
    # Leading "parallel" axis engages both TensorCores on v7x; collapse it
    # when there is only a single tile (no wasted duplicate work on 1-TC chips).
    num_p = 2 if tiles > 1 else 1
    inner = -(-tiles // num_p)

    def data_map(p, i):
        # Interleaved tile assignment (i*num_p + p) balances the two cores;
        # the single clamped out-of-range step (odd tile counts) is fully
        # masked inside the kernel via the logical tile index.
        return (jnp.minimum(i * num_p + p, tiles - 1), 0)

    kernel = functools.partial(
        _focal_loss_kernel, alpha=float(alpha), gamma=gamma,
        ignore_index=int(ignore_index), k=k, m_rows=m_rows)

    x_spec = pl.BlockSpec((tile_m, kc), data_map)
    t_spec = pl.BlockSpec((tile_m, k), data_map)
    out_specs = [pl.BlockSpec((None, 1, 1), lambda p, i: (p, 0, 0)),
                 pl.BlockSpec((None, 1, 1), lambda p, i: (p, 0, 0))]
    out_shape = (jax.ShapeDtypeStruct((num_p, 1, 1), jnp.float32),
                 jax.ShapeDtypeStruct((num_p, 1, 1), jnp.float32))

    if k > 1:
        # Small constant one-hot matrices, built once in the wrapper and kept
        # resident in VMEM (constant block index).
        j = jnp.arange(kc, dtype=jnp.int32)
        seg = j // c
        within = (j - seg * c).astype(jnp.float32).reshape(1, kc)   # (1, kc)
        s_mat = (seg[:, None] ==
                 jnp.arange(k, dtype=jnp.int32)[None, :]).astype(jnp.float32)
        r_mat = s_mat.T                                             # (k, kc)
        in_specs = [pl.BlockSpec((1, kc), lambda p, i: (0, 0)),
                    pl.BlockSpec((kc, k), lambda p, i: (0, 0)),
                    pl.BlockSpec((k, kc), lambda p, i: (0, 0)),
                    x_spec, t_spec]
        args = (within, s_mat, r_mat, x_packed, t_packed)
    else:
        in_specs = [x_spec, t_spec]
        args = (x_packed, t_packed)

    sums, cnts = pl.pallas_call(
        kernel,
        out_shape=out_shape,
        grid_spec=pltpu.PrefetchScalarGridSpec(
            num_scalar_prefetch=0,
            grid=(num_p, inner),
            in_specs=in_specs,
            out_specs=out_specs),
        compiler_params=pltpu.CompilerParams(
            dimension_semantics=("parallel", "arbitrary"),
            vmem_limit_bytes=_vmem_limit_bytes()),
    )(*args)

    # reduction='mean' over non-ignored rows (NLLLoss semantics).  NaN when
    # every target is ignore_index, matching torch's NLLLoss(mean).
    loss = jnp.sum(sums) / jnp.sum(cnts)
    return loss.astype(inputs.dtype)


def _reference(inputs, targets, *, alpha=1.0, gamma=2.0, ignore_index=-1):
    log_probs = jax.nn.log_softmax(inputs.astype(jnp.float32), axis=-1)
    probs = jnp.exp(log_probs)
    weighted = alpha * (1.0 - probs) ** gamma * log_probs
    picked = jnp.take_along_axis(
        weighted, jnp.clip(targets, 0, None)[:, None], axis=-1)[:, 0]
    valid = targets != ignore_index
    return jnp.sum(jnp.where(valid, -picked, 0.0)) / jnp.sum(valid)


if __name__ == "__main__":
    key = jax.random.PRNGKey(0)
    ks = jax.random.split(key, 8)

    # Case 1: small packed case (C=8 -> 16 rows per 128-lane row), some ignored.
    N, C = 16, 8
    logits = jax.random.normal(ks[0], (N, C), dtype=jnp.float32)
    targets = jax.random.randint(ks[1], (N,), 0, C, dtype=jnp.int32)
    targets = jnp.where(jax.random.bernoulli(ks[2], 0.25, (N,)),
                        jnp.int32(-1), targets)
    loss = focal_loss_with_logits(logits, targets)
    jax.block_until_ready(loss)
    ref = _reference(logits, targets)
    assert jnp.allclose(loss, ref, atol=2e-5, rtol=1e-5), (loss, ref)

    # Case 2: N not a multiple of the packing factor (padding path).
    N2, C2 = 45, 8
    logits2 = jax.random.normal(ks[3], (N2, C2), dtype=jnp.float32)
    targets2 = jax.random.randint(ks[4], (N2,), 0, C2, dtype=jnp.int32)
    targets2 = targets2.at[::7].set(-1)
    loss2 = focal_loss_with_logits(logits2, targets2)
    jax.block_until_ready(loss2)
    ref2 = _reference(logits2, targets2)
    assert jnp.allclose(loss2, ref2, atol=2e-5, rtol=1e-5), (loss2, ref2)

    # Case 3: multi-tile grid with an odd tile count -> exercises the
    # interleaved megacore split and the clamped, fully-masked duplicate tile.
    N3, C3 = 384, 8
    logits3 = jax.random.normal(ks[5], (N3, C3), dtype=jnp.float32)
    targets3 = jax.random.randint(ks[6], (N3,), 0, C3, dtype=jnp.int32)
    targets3 = targets3.at[::11].set(-1)
    loss3 = focal_loss_with_logits(logits3, targets3, tile_rows=8)
    jax.block_until_ready(loss3)
    ref3 = _reference(logits3, targets3)
    assert jnp.allclose(loss3, ref3, atol=2e-5, rtol=1e-5), (loss3, ref3)

    # Case 4: large class count (C > 64) -> unpacked (k == 1) path.
    N4, C4 = 32, 200
    logits4 = jax.random.normal(ks[7], (N4, C4), dtype=jnp.float32)
    targets4 = jax.random.randint(ks[0], (N4,), 0, C4, dtype=jnp.int32)
    targets4 = targets4.at[::5].set(-1)
    loss4 = focal_loss_with_logits(logits4, targets4)
    jax.block_until_ready(loss4)
    ref4 = _reference(logits4, targets4)
    assert jnp.allclose(loss4, ref4, atol=2e-5, rtol=1e-5), (loss4, ref4)

    # Case 5: bf16 logits passthrough (upcast inside the kernel).
    logits5 = jax.random.normal(ks[1], (64, 8), dtype=jnp.bfloat16)
    targets5 = jax.random.randint(ks[2], (64,), 0, 8, dtype=jnp.int32)
    loss5 = focal_loss_with_logits(logits5, targets5)
    jax.block_until_ready(loss5)
    ref5 = _reference(logits5.astype(jnp.float32), targets5)
    assert jnp.allclose(loss5.astype(jnp.float32), ref5,
                        atol=2e-2, rtol=2e-2), (loss5, ref5)

    print("KERNEL_OK")
</pallas_src>

<mosaic_0001>
module attributes {stable_mosaic.version = 11 : i64} {
  func.func @_focal_loss_kernel(%arg0: i32, %arg1: i32, %arg2: memref<1x128xf32, #tpu.memory_space<vmem>>, %arg3: memref<128x16xf32, #tpu.memory_space<vmem>>, %arg4: memref<16x128xf32, #tpu.memory_space<vmem>>, %arg5: memref<8x128xf32, #tpu.memory_space<vmem>>, %arg6: memref<8x16xi32, #tpu.memory_space<vmem>>, %arg7: memref<1x1x1xf32, #tpu.memory_space<vmem>>, %arg8: memref<1x1x1xf32, #tpu.memory_space<vmem>>) attributes {dimension_semantics = [#tpu.dimension_semantics<parallel>, #tpu.dimension_semantics<arbitrary>], iteration_bounds = array<i64: 1, 1>, scalar_prefetch = 0 : i64, scratch_operands = 0 : i64, tpu.core_type = #tpu.core_type<tc>, window_params = [{pipeline_mode = #tpu.pipeline_mode<synchronous>, transform_indices = @transform_0, window_bounds = array<i64: 1, 128>}, {pipeline_mode = #tpu.pipeline_mode<synchronous>, transform_indices = @transform_1, window_bounds = array<i64: 128, 16>}, {pipeline_mode = #tpu.pipeline_mode<synchronous>, transform_indices = @transform_2, window_bounds = array<i64: 16, 128>}, {transform_indices = @transform_3, window_bounds = array<i64: 8, 128>}, {transform_indices = @transform_4, window_bounds = array<i64: 8, 16>}, {transform_indices = @transform_5, window_bounds = array<i64: 1, 1, 1>}, {transform_indices = @transform_6, window_bounds = array<i64: 1, 1, 1>}]} {
    %c0_i32 = arith.constant 0 : i32
    %0 = arith.cmpi eq, %arg1, %c0_i32 : i32
    %1 = arith.extui %0 : i1 to i32
    %c0_i32_0 = arith.constant 0 : i32
    %2 = arith.cmpi ne, %1, %c0_i32_0 : i32
    scf.if %2 {
      %cst_35 = arith.constant 0.000000e+00 : f32
      %69 = vector.broadcast %cst_35 : f32 to vector<1x1xf32>
      %c0_36 = arith.constant 0 : index
      %c0_37 = arith.constant 0 : index
      %c0_38 = arith.constant 0 : index
      %70 = vector.load %arg7[%c0_36, %c0_37, %c0_38] : memref<1x1x1xf32, #tpu.memory_space<vmem>>, vector<1x1x1xf32>
      %71 = vector.shape_cast %70 : vector<1x1x1xf32> to vector<1x1xf32>
      %72 = vector.shape_cast %69 : vector<1x1xf32> to vector<1x1x1xf32>
      tpu.vector_store %arg7[%c0_36, %c0_37, %c0_38], %72 {strides = array<i32>} : memref<1x1x1xf32, #tpu.memory_space<vmem>>, vector<1x1x1xf32>,
      %cst_39 = arith.constant 0.000000e+00 : f32
      %73 = vector.broadcast %cst_39 : f32 to vector<1x1xf32>
      %c0_40 = arith.constant 0 : index
      %c0_41 = arith.constant 0 : index
      %c0_42 = arith.constant 0 : index
      %74 = vector.load %arg8[%c0_40, %c0_41, %c0_42] : memref<1x1x1xf32, #tpu.memory_space<vmem>>, vector<1x1x1xf32>
      %75 = vector.shape_cast %74 : vector<1x1x1xf32> to vector<1x1xf32>
      %76 = vector.shape_cast %73 : vector<1x1xf32> to vector<1x1x1xf32>
      tpu.vector_store %arg8[%c0_40, %c0_41, %c0_42], %76 {strides = array<i32>} : memref<1x1x1xf32, #tpu.memory_space<vmem>>, vector<1x1x1xf32>,
    } else {
    }
    %c0 = arith.constant 0 : index
    %c0_1 = arith.constant 0 : index
    %3 = vector.load %arg5[%c0, %c0_1] : memref<8x128xf32, #tpu.memory_space<vmem>>, vector<8x128xf32>
    %c0_2 = arith.constant 0 : index
    %c0_3 = arith.constant 0 : index
    %4 = vector.load %arg6[%c0_2, %c0_3] : memref<8x16xi32, #tpu.memory_space<vmem>>, vector<8x16xi32>
    %cst = arith.constant dense<0xFF800000> : vector<8xf32>
    %5 = vector.multi_reduction <maximumf>, %3, %cst [1] : vector<8x128xf32> to vector<8xf32>
    %6 = vector.shape_cast %5 : vector<8xf32> to vector<8x1xf32>
    %7 = vector.broadcast %6 : vector<8x1xf32> to vector<8x128xf32>
    %8 = arith.subf %3, %7 : vector<8x128xf32>
    %9 = math.exp %8 : vector<8x128xf32>
    %c0_4 = arith.constant 0 : index
    %c0_5 = arith.constant 0 : index
    %10 = vector.load %arg3[%c0_4, %c0_5] : memref<128x16xf32, #tpu.memory_space<vmem>>, vector<128x16xf32>
    %c0_6 = arith.constant 0 : index
    %c0_7 = arith.constant 0 : index
    %11 = vector.load %arg4[%c0_6, %c0_7] : memref<16x128xf32, #tpu.memory_space<vmem>>, vector<16x128xf32>
    %c0_8 = arith.constant 0 : index
    %c0_9 = arith.constant 0 : index
    %12 = vector.load %arg2[%c0_8, %c0_9] : memref<1x128xf32, #tpu.memory_space<vmem>>, vector<1x128xf32>
    %cst_10 = arith.constant dense<0.000000e+00> : vector<8x16xf32>
    %13 = tpu.matmul %9, %10, %cst_10 {dimension_numbers = #tpu.dot_dimension_numbers<[1], [0], [0], [1], [0, 0, 1, 1], [], []>, precision = #tpu.contract_precision<fp32>} : vector<8x128xf32>, vector<128x16xf32>, vector<8x16xf32> -> vector<8x16xf32>
    %14 = arith.sitofp %4 : vector<8x16xi32> to vector<8x16xf32>
    %cst_11 = arith.constant dense<0.000000e+00> : vector<8x128xf32>
    %15 = tpu.matmul %14, %11, %cst_11 {dimension_numbers = #tpu.dot_dimension_numbers<[1], [0], [0], [1], [0, 0, 1, 1], [], []>, precision = #tpu.contract_precision<fp32>} : vector<8x16xf32>, vector<16x128xf32>, vector<8x128xf32> -> vector<8x128xf32>
    %16 = vector.broadcast %12 : vector<1x128xf32> to vector<8x128xf32>
    %17 = arith.cmpf oeq, %15, %16 : vector<8x128xf32>
    %cst_12 = arith.constant 0.000000e+00 : f32
    %18 = vector.broadcast %cst_12 : f32 to vector<8x128xf32>
    %19 = arith.select %17, %3, %18 : vector<8x128xi1>, vector<8x128xf32>
    %cst_13 = arith.constant dense<0.000000e+00> : vector<8x16xf32>
    %20 = tpu.matmul %19, %10, %cst_13 {dimension_numbers = #tpu.dot_dimension_numbers<[1], [0], [0], [1], [0, 0, 1, 1], [], []>, precision = #tpu.contract_precision<fp32>} : vector<8x128xf32>, vector<128x16xf32>, vector<8x16xf32> -> vector<8x16xf32>
    %21 = math.log %13 : vector<8x16xf32>
    %22 = vector.broadcast %6 : vector<8x1xf32> to vector<8x16xf32>
    %23 = arith.addf %22, %21 : vector<8x16xf32>
    %24 = arith.subf %20, %23 : vector<8x16xf32>
    %25 = math.exp %24 : vector<8x16xf32>
    %cst_14 = arith.constant 1.000000e+00 : f32
    %26 = vector.broadcast %cst_14 : f32 to vector<8x16xf32>
    %27 = arith.subf %26, %25 : vector<8x16xf32>
    %28 = arith.mulf %27, %27 : vector<8x16xf32>
    %cst_15 = arith.constant 1.000000e+00 : f32
    %29 = vector.broadcast %cst_15 : f32 to vector<8x16xf32>
    %30 = arith.mulf %29, %28 : vector<8x16xf32>
    %31 = arith.mulf %30, %24 : vector<8x16xf32>
    %c1_i32 = arith.constant 1 : i32
    %32 = arith.muli %arg1, %c1_i32 : i32
    %33 = arith.addi %32, %arg0 : i32
    %c8_i32 = arith.constant 8 : i32
    %34 = arith.muli %33, %c8_i32 : i32
    %35 = tpu.iota {dimensions = array<i32: 0>} : vector<8x16xi32>
    %36 = vector.broadcast %34 : i32 to vector<8x16xi32>
    %37 = arith.addi %36, %35 : vector<8x16xi32>
    %c-1_i32 = arith.constant -1 : i32
    %38 = vector.broadcast %c-1_i32 : i32 to vector<8x16xi32>
    %39 = arith.cmpi ne, %4, %38 : vector<8x16xi32>
    %c8_i32_16 = arith.constant 8 : i32
    %40 = vector.broadcast %c8_i32_16 : i32 to vector<8x16xi32>
    %41 = arith.cmpi slt, %37, %40 : vector<8x16xi32>
    %42 = arith.andi %39, %41 : vector<8x16xi1>
    %cst_17 = arith.constant 0.000000e+00 : f32
    %43 = vector.broadcast %cst_17 : f32 to vector<8x16xf32>
    %44 = arith.subf %43, %31 : vector<8x16xf32>
    %cst_18 = arith.constant 0.000000e+00 : f32
    %45 = vector.broadcast %cst_18 : f32 to vector<8x16xf32>
    %46 = arith.select %42, %44, %45 : vector<8x16xi1>, vector<8x16xf32>
    %47 = arith.extui %42 : vector<8x16xi1> to vector<8x16xi32>
    %48 = arith.sitofp %47 : vector<8x16xi32> to vector<8x16xf32>
    %c0_19 = arith.constant 0 : index
    %c0_20 = arith.constant 0 : index
    %c0_21 = arith.constant 0 : index
    %49 = vector.load %arg7[%c0_19, %c0_20, %c0_21] : memref<1x1x1xf32, #tpu.memory_space<vmem>>, vector<1x1x1xf32>
    %50 = vector.shape_cast %49 : vector<1x1x1xf32> to vector<1x1xf32>
    %cst_22 = arith.constant dense<0.000000e+00> : vector<16xf32>
    %51 = vector.multi_reduction <add>, %46, %cst_22 [0] : vector<8x16xf32> to vector<16xf32>
    %52 = vector.shape_cast %51 : vector<16xf32> to vector<1x16xf32>
    %cst_23 = arith.constant dense<0.000000e+00> : vector<1xf32>
    %53 = vector.multi_reduction <add>, %52, %cst_23 [1] : vector<1x16xf32> to vector<1xf32>
    %54 = vector.shape_cast %53 : vector<1xf32> to vector<1x1xf32>
    %55 = arith.addf %50, %54 : vector<1x1xf32>
    %c0_24 = arith.constant 0 : index
    %c0_25 = arith.constant 0 : index
    %c0_26 = arith.constant 0 : index
    %56 = vector.load %arg7[%c0_24, %c0_25, %c0_26] : memref<1x1x1xf32, #tpu.memory_space<vmem>>, vector<1x1x1xf32>
    %57 = vector.shape_cast %56 : vector<1x1x1xf32> to vector<1x1xf32>
    %58 = vector.shape_cast %55 : vector<1x1xf32> to vector<1x1x1xf32>
    tpu.vector_store %arg7[%c0_24, %c0_25, %c0_26], %58 {strides = array<i32>} : memref<1x1x1xf32, #tpu.memory_space<vmem>>, vector<1x1x1xf32>,
    %c0_27 = arith.constant 0 : index
    %c0_28 = arith.constant 0 : index
    %c0_29 = arith.constant 0 : index
    %59 = vector.load %arg8[%c0_27, %c0_28, %c0_29] : memref<1x1x1xf32, #tpu.memory_space<vmem>>, vector<1x1x1xf32>
    %60 = vector.shape_cast %59 : vector<1x1x1xf32> to vector<1x1xf32>
    %cst_30 = arith.constant dense<0.000000e+00> : vector<16xf32>
    %61 = vector.multi_reduction <add>, %48, %cst_30 [0] : vector<8x16xf32> to vector<16xf32>
    %62 = vector.shape_cast %61 : vector<16xf32> to vector<1x16xf32>
    %cst_31 = arith.constant dense<0.000000e+00> : vector<1xf32>
    %63 = vector.multi_reduction <add>, %62, %cst_31 [1] : vector<1x16xf32> to vector<1xf32>
    %64 = vector.shape_cast %63 : vector<1xf32> to vector<1x1xf32>
    %65 = arith.addf %60, %64 : vector<1x1xf32>
    %c0_32 = arith.constant 0 : index
    %c0_33 = arith.constant 0 : index
    %c0_34 = arith.constant 0 : index
    %66 = vector.load %arg8[%c0_32, %c0_33, %c0_34] : memref<1x1x1xf32, #tpu.memory_space<vmem>>, vector<1x1x1xf32>
    %67 = vector.shape_cast %66 : vector<1x1x1xf32> to vector<1x1xf32>
    %68 = vector.shape_cast %65 : vector<1x1xf32> to vector<1x1x1xf32>
    tpu.vector_store %arg8[%c0_32, %c0_33, %c0_34], %68 {strides = array<i32>} : memref<1x1x1xf32, #tpu.memory_space<vmem>>, vector<1x1x1xf32>,
    return
  }
  func.func @transform_0(%arg0: i32, %arg1: i32) -> (i32, i32) {
    %c0_i32 = arith.constant 0 : i32
    %c0_i32_0 = arith.constant 0 : i32
    %c0_i32_1 = arith.constant 0 : i32
    return %c0_i32, %c0_i32_0 : i32, i32
  }
  func.func @transform_1(%arg0: i32, %arg1: i32) -> (i32, i32) {
    %c0_i32 = arith.constant 0 : i32
    %c0_i32_0 = arith.constant 0 : i32
    %c0_i32_1 = arith.constant 0 : i32
    return %c0_i32, %c0_i32_0 : i32, i32
  }
  func.func @transform_2(%arg0: i32, %arg1: i32) -> (i32, i32) {
    %c0_i32 = arith.constant 0 : i32
    %c0_i32_0 = arith.constant 0 : i32
    %c0_i32_1 = arith.constant 0 : i32
    return %c0_i32, %c0_i32_0 : i32, i32
  }
  func.func @transform_3(%arg0: i32, %arg1: i32) -> (i32, i32) {
    %c1_i32 = arith.constant 1 : i32
    %0 = arith.muli %arg1, %c1_i32 : i32
    %1 = arith.addi %0, %arg0 : i32
    %c0_i32 = arith.constant 0 : i32
    %2 = arith.minsi %1, %c0_i32 : i32
    %c0_i32_0 = arith.constant 0 : i32
    %c0_i32_1 = arith.constant 0 : i32
    return %2, %c0_i32_0 : i32, i32
  }
  func.func @transform_4(%arg0: i32, %arg1: i32) -> (i32, i32) {
    %c1_i32 = arith.constant 1 : i32
    %0 = arith.muli %arg1, %c1_i32 : i32
    %1 = arith.addi %0, %arg0 : i32
    %c0_i32 = arith.constant 0 : i32
    %2 = arith.minsi %1, %c0_i32 : i32
    %c0_i32_0 = arith.constant 0 : i32
    %c0_i32_1 = arith.constant 0 : i32
    return %2, %c0_i32_0 : i32, i32
  }
  func.func @transform_5(%arg0: i32, %arg1: i32) -> (i32, i32, i32) {
    %c0_i32 = arith.constant 0 : i32
    %c0_i32_0 = arith.constant 0 : i32
    %c0_i32_1 = arith.constant 0 : i32
    return %arg0, %c0_i32, %c0_i32_0 : i32, i32, i32
  }
  func.func @transform_6(%arg0: i32, %arg1: i32) -> (i32, i32, i32) {
    %c0_i32 = arith.constant 0 : i32
    %c0_i32_0 = arith.constant 0 : i32
    %c0_i32_1 = arith.constant 0 : i32
    return %arg0, %c0_i32, %c0_i32_0 : i32, i32, i32
  }
}

</mosaic_0001>

<llo_original>
// kernel: tpu_custom_call.1
$region0: #{tpu_custom_call.1}
  #allocation0 [shape = 'u32[]', space=smem, size = 0x4, offset = 0x4, fixed_abs, tag = 'smem constant byte address 0x4 - core index']
  #allocation1 [shape = 'u32[144,128]{1,0:T(1,128)}', space=vmem, size = 0x12000, scoped, tag = 'internal scratch']
  %s0 = inlined_call_operand.vmem [shape: f32[1,128], index: 0, kind: input, shape index: {}]
  %s1 = inlined_call_operand.vmem [shape: f32[128,16], index: 1, kind: input, shape index: {}]
  %s2 = inlined_call_operand.vmem [shape: f32[16,128], index: 2, kind: input, shape index: {}]
  %s3 = inlined_call_operand.vmem [shape: f32[8,128], index: 3, kind: input, shape index: {}]
  %s4 = inlined_call_operand.vmem [shape: s32[8,16], index: 4, kind: input, shape index: {}]
  %s5 = inlined_call_operand.hbm [shape: f32[1,1,1], index: 5, kind: output, shape index: {0}]
  %s6 = inlined_call_operand.hbm [shape: f32[1,1,1], index: 6, kind: output, shape index: {1}]
  %7 = xla_tuple %s5, %s6
  %s8 = sld [smem:[#allocation0]]
  $region42: #{tpu_custom_call.1} parent=0
    _
  %s10 = ssub.s32 1, %s8
  %s11 = scalar_select 0, %s10, %s8
  $region1: #{tpu_custom_call.1} parent=0
    #allocation2 [shape = 'u8[512]{0}', space=vmem, size = 0x400, scoped, tag = 'output window, operand 0, single buffered']
    #allocation3 [shape = 's32[1]{0}', space=sflag, size = 0x4, scoped, tag = 'scoped memory for tpu_custom_call.1']
    #allocation4 [shape = 'u8[512]{0}', space=vmem, size = 0x400, scoped, tag = 'output window, operand 1, single buffered']
    #allocation5 [shape = 's32[1]{0}', space=sflag, size = 0x4, scoped, tag = 'scoped memory for tpu_custom_call.1']
    %12 = vsyncpa [#allocation3], 0
    %13 = vsyncpa [#allocation5], 0
    // Predicated region
    $region2: #{tpu_custom_call.1} parent=1 // pred_check
      _
    $region3: #{tpu_custom_call.1} parent=1 // pred_check_branch
      %15 = sbr.rel (0) target = $region5
    $region4: #{tpu_custom_call.1} parent=1 // pred_region
      _
    $region5: #{tpu_custom_call.1} parent=1 // pred_fallthru
      _
    // Predicated region
    $region6: #{tpu_custom_call.1} parent=1 // pred_check
      _
    $region7: #{tpu_custom_call.1} parent=1 // pred_check_branch
      %17 = sbr.rel (0) target = $region9
    $region8: #{tpu_custom_call.1} parent=1 // pred_region
      _
    $region9: #{tpu_custom_call.1} parent=1 // pred_fallthru
      _
    // Predicated region
    $region10: #{tpu_custom_call.1} parent=1 // pred_check
      _
    $region11: #{tpu_custom_call.1} parent=1 // pred_check_branch
      %19 = sbr.rel (0) target = $region13
    $region12: #{tpu_custom_call.1} parent=1 // pred_region
      _
    $region13: #{tpu_custom_call.1} parent=1 // pred_fallthru
      _
    // Predicated region
    $region14: #{tpu_custom_call.1} parent=1 // pred_check
      _
    $region15: #{tpu_custom_call.1} parent=1 // pred_check_branch
      %21 = sbr.rel (0) target = $region17
    $region16: #{tpu_custom_call.1} parent=1 // pred_region
      %s22 = sadd.s32 0, 0
      %p23 = scmp.lt.s32.totalorder %s22, 0
      %s24 = scalar_select %p23, %s22, 0
      %p25 = scmp.lt.s32.totalorder %s24, 0
      %s26 = scalar_select %p25, %s24, 0
      %s27 = smul.addr %s26, 8
      %s28 = scalar_lea.vmem %s3, %s27
      %s29 = sadd.s32 0, 0
      %p30 = scmp.lt.s32.totalorder %s29, 0
      %s31 = scalar_select %p30, %s29, 0
    $region17: #{tpu_custom_call.1} parent=1 // pred_fallthru
      _
    // Predicated region
    $region18: #{tpu_custom_call.1} parent=1 // pred_check
      _
    $region19: #{tpu_custom_call.1} parent=1 // pred_check_branch
      %33 = sbr.rel (0) target = $region21
    $region20: #{tpu_custom_call.1} parent=1 // pred_region
      %s34 = sadd.s32 0, 0
      %p35 = scmp.lt.s32.totalorder %s34, 0
      %s36 = scalar_select %p35, %s34, 0
      %p37 = scmp.lt.s32.totalorder %s36, 0
      %s38 = scalar_select %p37, %s36, 0
      %s39 = smul.addr %s38, 8
      %s40 = scalar_lea.vmem %s4, %s39
      %s41 = sadd.s32 0, 0
      %p42 = scmp.lt.s32.totalorder %s41, 0
      %s43 = scalar_select %p42, %s41, 0
    $region21: #{tpu_custom_call.1} parent=1 // pred_fallthru
      _
    %s44 = sadd.s32 0, 0
    %p45 = scmp.lt.s32.totalorder %s44, 0
    %s46 = scalar_select %p45, %s44, 0
    %p47 = scmp.lt.s32.totalorder %s46, 0
    %s48 = scalar_select %p47, %s46, 0
    %s49 = smul.addr %s48, 8
    %s50 = scalar_lea.vmem %s3, %s49
    %s51 = sadd.s32 0, 0
    %p52 = scmp.lt.s32.totalorder %s51, 0
    %s53 = scalar_select %p52, %s51, 0
    %p54 = scmp.lt.s32.totalorder %s53, 0
    %s55 = scalar_select %p54, %s53, 0
    %s56 = smul.addr %s55, 8
    %s57 = scalar_lea.vmem %s4, %s56
    %s58 = sadd.s32 0, 0
    %p59 = scmp.lt.s32.totalorder %s58, 0
    %s60 = scalar_select %p59, %s58, 0
    %p61 = scmp.lt.s32.totalorder %s60, 0
    %s62 = scalar_select %p61, %s60, 0
    %s63 = smul.addr %s62, 8
    %s64 = scalar_lea.vmem %s3, %s63
    %s65 = sadd.s32 0, 0
    %p66 = scmp.lt.s32.totalorder %s65, 0
    %s67 = scalar_select %p66, %s65, 0
    %s68 = sadd.s32 0, 0
    %p69 = scmp.lt.s32.totalorder %s68, 0
    %s70 = scalar_select %p69, %s68, 0
    %p71 = scmp.lt.s32.totalorder %s70, 0
    %s72 = scalar_select %p71, %s70, 0
    %s73 = smul.addr %s72, 8
    %s74 = scalar_lea.vmem %s4, %s73
    %s75 = sadd.s32 0, 0
    %p76 = scmp.lt.s32.totalorder %s75, 0
    %s77 = scalar_select %p76, %s75, 0
    %p78 = scmp.eq.s32.totalorder 0, 0
    // Predicated region
    $region22: #{tpu_custom_call.1} parent=1 // pred_check
      %p79 = pneg %p78
    $region23: #{tpu_custom_call.1} parent=1 // pred_check_branch
      %81 = sbr.rel (%p79) target = $region25
    $region24: #{tpu_custom_call.1} parent=1 // pred_region
      %vm82 = vcmask 0
      %83 = vst.msk [vmem:[#allocation2] sm:$0x1] %vm82, 0.0
      %84 = vst.msk [vmem:[#allocation4] sm:$0x1] %vm82, 0.0
    $region25: #{tpu_custom_call.1} parent=1 // pred_fallthru
      _
    %v85 = vld [vmem:[%s64] sm:$0xff]
    %v86 = vld [vmem:[%s74] sm:$0xff]
    %87 = vmax.xlane.f32.xlu0 %v85
    %v88 = vpop.xlane.xlu0 %87
    %v89 = vsub.f32 %v85, %v88
    %v90 = vmul.f32 %v89, 1.442695
    %v91 = vpow.pop %v90
    %v92 = vld [vmem:[%s1] sm:$0xff]
    %v93 = vld [vmem:[%s1 + $0x8] sm:$0xff]
    %v94 = vld [vmem:[%s1 + $0x10] sm:$0xff]
    %v95 = vld [vmem:[%s1 + $0x18] sm:$0xff]
    %v96 = vld [vmem:[%s1 + $0x20] sm:$0xff]
    %v97 = vld [vmem:[%s1 + $0x28] sm:$0xff]
    %v98 = vld [vmem:[%s1 + $0x30] sm:$0xff]
    %v99 = vld [vmem:[%s1 + $0x38] sm:$0xff]
    %v100 = vld [vmem:[%s1 + $0x40] sm:$0xff]
    %v101 = vld [vmem:[%s1 + $0x48] sm:$0xff]
    %v102 = vld [vmem:[%s1 + $0x50] sm:$0xff]
    %v103 = vld [vmem:[%s1 + $0x58] sm:$0xff]
    %v104 = vld [vmem:[%s1 + $0x60] sm:$0xff]
    %v105 = vld [vmem:[%s1 + $0x68] sm:$0xff]
    %v106 = vld [vmem:[%s1 + $0x70] sm:$0xff]
    %v107 = vld [vmem:[%s1 + $0x78] sm:$0xff]
    %v108 = vld [vmem:[%s2] sm:$0xff]
    %v109 = vld [vmem:[%s2 + $0x8] sm:$0xff]
    %v110 = vld [vmem:[%s0] sm:$0x1]
    %111 = vmatprep.subr.mxu0 0.0
    %v112 = vand.u32 %v92, 4294901760
    %113 = vmatpush1.msra.mxu0 %v112
    %114 = vmatprep.subr.mxu0 0.0
    %v115 = vand.u32 %v93, 4294901760
    %116 = vmatpush1.msra.mxu0 %v115
    %117 = vmatprep.subr.mxu0 0.0
    %v118 = vand.u32 %v94, 4294901760
    %119 = vmatpush1.msra.mxu0 %v118
    %120 = vmatprep.subr.mxu0 0.0
    %v121 = vand.u32 %v95, 4294901760
    %122 = vmatpush1.msra.mxu0 %v121
    %123 = vmatprep.subr.mxu0 0.0
    %v124 = vand.u32 %v96, 4294901760
    %125 = vmatpush1.msra.mxu0 %v124
    %126 = vmatprep.subr.mxu0 0.0
    %v127 = vand.u32 %v97, 4294901760
    %128 = vmatpush1.msra.mxu0 %v127
    %129 = vmatprep.subr.mxu0 0.0
    %v130 = vand.u32 %v98, 4294901760
    %131 = vmatpush1.msra.mxu0 %v130
    %132 = vmatprep.subr.mxu0 0.0
    %v133 = vand.u32 %v99, 4294901760
    %134 = vmatpush1.msra.mxu0 %v133
    %135 = vmatprep.subr.mxu0 0.0
    %v136 = vand.u32 %v100, 4294901760
    %137 = vmatpush1.msra.mxu0 %v136
    %138 = vmatprep.subr.mxu0 0.0
    %v139 = vand.u32 %v101, 4294901760
    %140 = vmatpush1.msra.mxu0 %v139
    %141 = vmatprep.subr.mxu0 0.0
    %v142 = vand.u32 %v102, 4294901760
    %143 = vmatpush1.msra.mxu0 %v142
    %144 = vmatprep.subr.mxu0 0.0
    %v145 = vand.u32 %v103, 4294901760
    %146 = vmatpush1.msra.mxu0 %v145
    %147 = vmatprep.subr.mxu0 0.0
    %v148 = vand.u32 %v104, 4294901760
    %149 = vmatpush1.msra.mxu0 %v148
    %150 = vmatprep.subr.mxu0 0.0
    %v151 = vand.u32 %v105, 4294901760
    %152 = vmatpush1.msra.mxu0 %v151
    %153 = vmatprep.subr.mxu0 0.0
    %v154 = vand.u32 %v106, 4294901760
    %155 = vmatpush1.msra.mxu0 %v154
    %156 = vmatprep.subr.mxu0 0.0
    %v157 = vand.u32 %v107, 4294901760
    %158 = vmatpush1.msra.mxu0 %v157
    %159 = vmatprep.subr.mxu0 0.0
    %160 = vmatpush1.msra.mxu0 0.0
    %161 = vmatprep.subr.mxu0 0.0
    %162 = vmatpush1.msra.mxu0 0.0
    %163 = vmatprep.subr.mxu0 0.0
    %164 = vmatpush1.msra.mxu0 0.0
    %165 = vmatprep.subr.mxu0 0.0
    %166 = vmatpush1.msra.mxu0 0.0
    %167 = vmatprep.subr.mxu0 0.0
    %168 = vmatpush1.msra.mxu0 0.0
    %169 = vmatprep.subr.mxu0 0.0
    %170 = vmatpush1.msra.mxu0 0.0
    %171 = vmatprep.subr.mxu0 0.0
    %172 = vmatpush1.msra.mxu0 0.0
    %173 = vmatprep.subr.mxu0 0.0
    %174 = vmatpush1.msra.mxu0 0.0
    %175 = vmatprep.subr.mxu0 0.0
    %176 = vmatpush1.msra.mxu0 0.0
    %177 = vmatprep.subr.mxu0 0.0
    %178 = vmatpush1.msra.mxu0 0.0
    %179 = vmatprep.subr.mxu0 0.0
    %180 = vmatpush1.msra.mxu0 0.0
    %181 = vmatprep.subr.mxu0 0.0
    %182 = vmatpush1.msra.mxu0 0.0
    %183 = vmatprep.subr.mxu0 0.0
    %184 = vmatpush1.msra.mxu0 0.0
    %185 = vmatprep.subr.mxu0 0.0
    %186 = vmatpush1.msra.mxu0 0.0
    %187 = vmatprep.subr.mxu0 0.0
    %188 = vmatpush1.msra.mxu0 0.0
    %189 = vmatprep.subr.mxu0 0.0
    %190 = vmatpush1.msra.mxu0 0.0
    %191 = vmatprep.mubr.f32.mxu0 0.0
    %v192 = vand.u32 %v91, 4294901760
    %v193 = vsub.f32 %v91, %v192
    %v194 = vand.u32 %v193, 4294901760
    %v195 = vsub.f32 %v193, %v194
    %v196 = vand.u32 %v195, 4294901760
    %197 = vmatmul.mubr.f32.gmra.mrb[0].mxu0 %v196
    %v198 = vpop.f32.mrb[0].mxu0
    %v199 = vadd.f32 0.0, %v198
    %v200 = vpop.f32.mrb[0].mxu0
    %201 = vdwg.mxu0
    %202 = vmatprep.subr.mxu0 0.0
    %v203 = vand.u32 %v92, 4294901760
    %v204 = vsub.f32 %v92, %v203
    %v205 = vand.u32 %v204, 4294901760
    %v206 = vsub.f32 %v204, %v205
    %v207 = vand.u32 %v206, 4294901760
    %208 = vmatpush1.msra.mxu0 %v207
    %209 = vmatprep.subr.mxu0 0.0
    %v210 = vand.u32 %v93, 4294901760
    %v211 = vsub.f32 %v93, %v210
    %v212 = vand.u32 %v211, 4294901760
    %v213 = vsub.f32 %v211, %v212
    %v214 = vand.u32 %v213, 4294901760
    %215 = vmatpush1.msra.mxu0 %v214
    %216 = vmatprep.subr.mxu0 0.0
    %v217 = vand.u32 %v94, 4294901760
    %v218 = vsub.f32 %v94, %v217
    %v219 = vand.u32 %v218, 4294901760
    %v220 = vsub.f32 %v218, %v219
    %v221 = vand.u32 %v220, 4294901760
    %222 = vmatpush1.msra.mxu0 %v221
    %223 = vmatprep.subr.mxu0 0.0
    %v224 = vand.u32 %v95, 4294901760
    %v225 = vsub.f32 %v95, %v224
    %v226 = vand.u32 %v225, 4294901760
    %v227 = vsub.f32 %v225, %v226
    %v228 = vand.u32 %v227, 4294901760
    %229 = vmatpush1.msra.mxu0 %v228
    %230 = vmatprep.subr.mxu0 0.0
    %v231 = vand.u32 %v96, 4294901760
    %v232 = vsub.f32 %v96, %v231
    %v233 = vand.u32 %v232, 4294901760
    %v234 = vsub.f32 %v232, %v233
    %v235 = vand.u32 %v234, 4294901760
    %236 = vmatpush1.msra.mxu0 %v235
    %237 = vmatprep.subr.mxu0 0.0
    %v238 = vand.u32 %v97, 4294901760
    %v239 = vsub.f32 %v97, %v238
    %v240 = vand.u32 %v239, 4294901760
    %v241 = vsub.f32 %v239, %v240
    %v242 = vand.u32 %v241, 4294901760
    %243 = vmatpush1.msra.mxu0 %v242
    %244 = vmatprep.subr.mxu0 0.0
    %v245 = vand.u32 %v98, 4294901760
    %v246 = vsub.f32 %v98, %v245
    %v247 = vand.u32 %v246, 4294901760
    %v248 = vsub.f32 %v246, %v247
    %v249 = vand.u32 %v248, 4294901760
    %250 = vmatpush1.msra.mxu0 %v249
    %251 = vmatprep.subr.mxu0 0.0
    %v252 = vand.u32 %v99, 4294901760
    %v253 = vsub.f32 %v99, %v252
    %v254 = vand.u32 %v253, 4294901760
    %v255 = vsub.f32 %v253, %v254
    %v256 = vand.u32 %v255, 4294901760
    %257 = vmatpush1.msra.mxu0 %v256
    %258 = vmatprep.subr.mxu0 0.0
    %v259 = vand.u32 %v100, 4294901760
    %v260 = vsub.f32 %v100, %v259
    %v261 = vand.u32 %v260, 4294901760
    %v262 = vsub.f32 %v260, %v261
    %v263 = vand.u32 %v262, 4294901760
    %264 = vmatpush1.msra.mxu0 %v263
    %265 = vmatprep.subr.mxu0 0.0
    %v266 = vand.u32 %v101, 4294901760
    %v267 = vsub.f32 %v101, %v266
    %v268 = vand.u32 %v267, 4294901760
    %v269 = vsub.f32 %v267, %v268
    %v270 = vand.u32 %v269, 4294901760
    %271 = vmatpush1.msra.mxu0 %v270
    %272 = vmatprep.subr.mxu0 0.0
    %v273 = vand.u32 %v102, 4294901760
    %v274 = vsub.f32 %v102, %v273
    %v275 = vand.u32 %v274, 4294901760
    %v276 = vsub.f32 %v274, %v275
    %v277 = vand.u32 %v276, 4294901760
    %278 = vmatpush1.msra.mxu0 %v277
    %279 = vmatprep.subr.mxu0 0.0
    %v280 = vand.u32 %v103, 4294901760
    %v281 = vsub.f32 %v103, %v280
    %v282 = vand.u32 %v281, 4294901760
    %v283 = vsub.f32 %v281, %v282
    %v284 = vand.u32 %v283, 4294901760
    %285 = vmatpush1.msra.mxu0 %v284
    %286 = vmatprep.subr.mxu0 0.0
    %v287 = vand.u32 %v104, 4294901760
    %v288 = vsub.f32 %v104, %v287
    %v289 = vand.u32 %v288, 4294901760
    %v290 = vsub.f32 %v288, %v289
    %v291 = vand.u32 %v290, 4294901760
    %292 = vmatpush1.msra.mxu0 %v291
    %293 = vmatprep.subr.mxu0 0.0
    %v294 = vand.u32 %v105, 4294901760
    %v295 = vsub.f32 %v105, %v294
    %v296 = vand.u32 %v295, 4294901760
    %v297 = vsub.f32 %v295, %v296
    %v298 = vand.u32 %v297, 4294901760
    %299 = vmatpush1.msra.mxu0 %v298
    %300 = vmatprep.subr.mxu0 0.0
    %v301 = vand.u32 %v106, 4294901760
    %v302 = vsub.f32 %v106, %v301
    %v303 = vand.u32 %v302, 4294901760
    %v304 = vsub.f32 %v302, %v303
    %v305 = vand.u32 %v304, 4294901760
    %306 = vmatpush1.msra.mxu0 %v305
    %307 = vmatprep.subr.mxu0 0.0
    %v308 = vand.u32 %v107, 4294901760
    %v309 = vsub.f32 %v107, %v308
    %v310 = vand.u32 %v309, 4294901760
    %v311 = vsub.f32 %v309, %v310
    %v312 = vand.u32 %v311, 4294901760
    %313 = vmatpush1.msra.mxu0 %v312
    %314 = vmatprep.subr.mxu0 0.0
    %315 = vmatpush1.msra.mxu0 0.0
    %316 = vmatprep.subr.mxu0 0.0
    %317 = vmatpush1.msra.mxu0 0.0
    %318 = vmatprep.subr.mxu0 0.0
    %319 = vmatpush1.msra.mxu0 0.0
    %320 = vmatprep.subr.mxu0 0.0
    %321 = vmatpush1.msra.mxu0 0.0
    %322 = vmatprep.subr.mxu0 0.0
    %323 = vmatpush1.msra.mxu0 0.0
    %324 = vmatprep.subr.mxu0 0.0
    %325 = vmatpush1.msra.mxu0 0.0
    %326 = vmatprep.subr.mxu0 0.0
    %327 = vmatpush1.msra.mxu0 0.0
    %328 = vmatprep.subr.mxu0 0.0
    %329 = vmatpush1.msra.mxu0 0.0
    %330 = vmatprep.subr.mxu0 0.0
    %331 = vmatpush1.msra.mxu0 0.0
    %332 = vmatprep.subr.mxu0 0.0
    %333 = vmatpush1.msra.mxu0 0.0
    %334 = vmatprep.subr.mxu0 0.0
    %335 = vmatpush1.msra.mxu0 0.0
    %336 = vmatprep.subr.mxu0 0.0
    %337 = vmatpush1.msra.mxu0 0.0
    %338 = vmatprep.subr.mxu0 0.0
    %339 = vmatpush1.msra.mxu0 0.0
    %340 = vmatprep.subr.mxu0 0.0
    %341 = vmatpush1.msra.mxu0 0.0
    %342 = vmatprep.subr.mxu0 0.0
    %343 = vmatpush1.msra.mxu0 0.0
    %344 = vmatprep.subr.mxu0 0.0
    %345 = vmatpush1.msra.mxu0 0.0
    %346 = vmatprep.mubr.f32.mxu0 0.0
    %v347 = vand.u32 %v91, 4294901760
    %348 = vmatmul.mubr.f32.gmra.mrb[0].mxu0 %v347
    %v349 = vpop.f32.mrb[0].mxu0
    %v350 = vadd.f32 %v199, %v349
    %v351 = vpop.f32.mrb[0].mxu0
    %352 = vdwg.mxu0
    %353 = vmatprep.subr.mxu0 0.0
    %v354 = vand.u32 %v92, 4294901760
    %v355 = vsub.f32 %v92, %v354
    %356 = vmatpush1.msra.mxu0 %v355
    %357 = vmatprep.subr.mxu0 0.0
    %v358 = vand.u32 %v93, 4294901760
    %v359 = vsub.f32 %v93, %v358
    %360 = vmatpush1.msra.mxu0 %v359
    %361 = vmatprep.subr.mxu0 0.0
    %v362 = vand.u32 %v94, 4294901760
    %v363 = vsub.f32 %v94, %v362
    %364 = vmatpush1.msra.mxu0 %v363
    %365 = vmatprep.subr.mxu0 0.0
    %v366 = vand.u32 %v95, 4294901760
    %v367 = vsub.f32 %v95, %v366
    %368 = vmatpush1.msra.mxu0 %v367
    %369 = vmatprep.subr.mxu0 0.0
    %v370 = vand.u32 %v96, 4294901760
    %v371 = vsub.f32 %v96, %v370
    %372 = vmatpush1.msra.mxu0 %v371
    %373 = vmatprep.subr.mxu0 0.0
    %v374 = vand.u32 %v97, 4294901760
    %v375 = vsub.f32 %v97, %v374
    %376 = vmatpush1.msra.mxu0 %v375
    %377 = vmatprep.subr.mxu0 0.0
    %v378 = vand.u32 %v98, 4294901760
    %v379 = vsub.f32 %v98, %v378
    %380 = vmatpush1.msra.mxu0 %v379
    %381 = vmatprep.subr.mxu0 0.0
    %v382 = vand.u32 %v99, 4294901760
    %v383 = vsub.f32 %v99, %v382
    %384 = vmatpush1.msra.mxu0 %v383
    %385 = vmatprep.subr.mxu0 0.0
    %v386 = vand.u32 %v100, 4294901760
    %v387 = vsub.f32 %v100, %v386
    %388 = vmatpush1.msra.mxu0 %v387
    %389 = vmatprep.subr.mxu0 0.0
    %v390 = vand.u32 %v101, 4294901760
    %v391 = vsub.f32 %v101, %v390
    %392 = vmatpush1.msra.mxu0 %v391
    %393 = vmatprep.subr.mxu0 0.0
    %v394 = vand.u32 %v102, 4294901760
    %v395 = vsub.f32 %v102, %v394
    %396 = vmatpush1.msra.mxu0 %v395
    %397 = vmatprep.subr.mxu0 0.0
    %v398 = vand.u32 %v103, 4294901760
    %v399 = vsub.f32 %v103, %v398
    %400 = vmatpush1.msra.mxu0 %v399
    %401 = vmatprep.subr.mxu0 0.0
    %v402 = vand.u32 %v104, 4294901760
    %v403 = vsub.f32 %v104, %v402
    %404 = vmatpush1.msra.mxu0 %v403
    %405 = vmatprep.subr.mxu0 0.0
    %v406 = vand.u32 %v105, 4294901760
    %v407 = vsub.f32 %v105, %v406
    %408 = vmatpush1.msra.mxu0 %v407
    %409 = vmatprep.subr.mxu0 0.0
    %v410 = vand.u32 %v106, 4294901760
    %v411 = vsub.f32 %v106, %v410
    %412 = vmatpush1.msra.mxu0 %v411
    %413 = vmatprep.subr.mxu0 0.0
    %v414 = vand.u32 %v107, 4294901760
    %v415 = vsub.f32 %v107, %v414
    %416 = vmatpush1.msra.mxu0 %v415
    %417 = vmatprep.subr.mxu0 0.0
    %418 = vmatpush1.msra.mxu0 0.0
    %419 = vmatprep.subr.mxu0 0.0
    %420 = vmatpush1.msra.mxu0 0.0
    %421 = vmatprep.subr.mxu0 0.0
    %422 = vmatpush1.msra.mxu0 0.0
    %423 = vmatprep.subr.mxu0 0.0
    %424 = vmatpush1.msra.mxu0 0.0
    %425 = vmatprep.subr.mxu0 0.0
    %426 = vmatpush1.msra.mxu0 0.0
    %427 = vmatprep.subr.mxu0 0.0
    %428 = vmatpush1.msra.mxu0 0.0
    %429 = vmatprep.subr.mxu0 0.0
    %430 = vmatpush1.msra.mxu0 0.0
    %431 = vmatprep.subr.mxu0 0.0
    %432 = vmatpush1.msra.mxu0 0.0
    %433 = vmatprep.subr.mxu0 0.0
    %434 = vmatpush1.msra.mxu0 0.0
    %435 = vmatprep.subr.mxu0 0.0
    %436 = vmatpush1.msra.mxu0 0.0
    %437 = vmatprep.subr.mxu0 0.0
    %438 = vmatpush1.msra.mxu0 0.0
    %439 = vmatprep.subr.mxu0 0.0
    %440 = vmatpush1.msra.mxu0 0.0
    %441 = vmatprep.subr.mxu0 0.0
    %442 = vmatpush1.msra.mxu0 0.0
    %443 = vmatprep.subr.mxu0 0.0
    %444 = vmatpush1.msra.mxu0 0.0
    %445 = vmatprep.subr.mxu0 0.0
    %446 = vmatpush1.msra.mxu0 0.0
    %447 = vmatprep.subr.mxu0 0.0
    %448 = vmatpush1.msra.mxu0 0.0
    %449 = vmatprep.mubr.f32.mxu0 0.0
    %v450 = vand.u32 %v91, 4294901760
    %v451 = vsub.f32 %v91, %v450
    %452 = vmatmul.mubr.f32.gmra.mrb[0].mxu0 %v451
    %v453 = vpop.f32.mrb[0].mxu0
    %v454 = vadd.f32 %v350, %v453
    %v455 = vpop.f32.mrb[0].mxu0
    %456 = vdwg.mxu0
    %457 = vmatprep.subr.mxu0 0.0
    %v458 = vand.u32 %v92, 4294901760
    %459 = vmatpush1.msra.mxu0 %v458
    %460 = vmatprep.subr.mxu0 0.0
    %v461 = vand.u32 %v93, 4294901760
    %462 = vmatpush1.msra.mxu0 %v461
    %463 = vmatprep.subr.mxu0 0.0
    %v464 = vand.u32 %v94, 4294901760
    %465 = vmatpush1.msra.mxu0 %v464
    %466 = vmatprep.subr.mxu0 0.0
    %v467 = vand.u32 %v95, 4294901760
    %468 = vmatpush1.msra.mxu0 %v467
    %469 = vmatprep.subr.mxu0 0.0
    %v470 = vand.u32 %v96, 4294901760
    %471 = vmatpush1.msra.mxu0 %v470
    %472 = vmatprep.subr.mxu0 0.0
    %v473 = vand.u32 %v97, 4294901760
    %474 = vmatpush1.msra.mxu0 %v473
    %475 = vmatprep.subr.mxu0 0.0
    %v476 = vand.u32 %v98, 4294901760
    %477 = vmatpush1.msra.mxu0 %v476
    %478 = vmatprep.subr.mxu0 0.0
    %v479 = vand.u32 %v99, 4294901760
    %480 = vmatpush1.msra.mxu0 %v479
    %481 = vmatprep.subr.mxu0 0.0
    %v482 = vand.u32 %v100, 4294901760
    %483 = vmatpush1.msra.mxu0 %v482
    %484 = vmatprep.subr.mxu0 0.0
    %v485 = vand.u32 %v101, 4294901760
    %486 = vmatpush1.msra.mxu0 %v485
    %487 = vmatprep.subr.mxu0 0.0
    %v488 = vand.u32 %v102, 4294901760
    %489 = vmatpush1.msra.mxu0 %v488
    %490 = vmatprep.subr.mxu0 0.0
    %v491 = vand.u32 %v103, 4294901760
    %492 = vmatpush1.msra.mxu0 %v491
    %493 = vmatprep.subr.mxu0 0.0
    %v494 = vand.u32 %v104, 4294901760
    %495 = vmatpush1.msra.mxu0 %v494
    %496 = vmatprep.subr.mxu0 0.0
    %v497 = vand.u32 %v105, 4294901760
    %498 = vmatpush1.msra.mxu0 %v497
    %499 = vmatprep.subr.mxu0 0.0
    %v500 = vand.u32 %v106, 4294901760
    %501 = vmatpush1.msra.mxu0 %v500
    %502 = vmatprep.subr.mxu0 0.0
    %v503 = vand.u32 %v107, 4294901760
    %504 = vmatpush1.msra.mxu0 %v503
    %505 = vmatprep.subr.mxu0 0.0
    %506 = vmatpush1.msra.mxu0 0.0
    %507 = vmatprep.subr.mxu0 0.0
    %508 = vmatpush1.msra.mxu0 0.0
    %509 = vmatprep.subr.mxu0 0.0
    %510 = vmatpush1.msra.mxu0 0.0
    %511 = vmatprep.subr.mxu0 0.0
    %512 = vmatpush1.msra.mxu0 0.0
    %513 = vmatprep.subr.mxu0 0.0
    %514 = vmatpush1.msra.mxu0 0.0
    %515 = vmatprep.subr.mxu0 0.0
    %516 = vmatpush1.msra.mxu0 0.0
    %517 = vmatprep.subr.mxu0 0.0
    %518 = vmatpush1.msra.mxu0 0.0
    %519 = vmatprep.subr.mxu0 0.0
    %520 = vmatpush1.msra.mxu0 0.0
    %521 = vmatprep.subr.mxu0 0.0
    %522 = vmatpush1.msra.mxu0 0.0
    %523 = vmatprep.subr.mxu0 0.0
    %524 = vmatpush1.msra.mxu0 0.0
    %525 = vmatprep.subr.mxu0 0.0
    %526 = vmatpush1.msra.mxu0 0.0
    %527 = vmatprep.subr.mxu0 0.0
    %528 = vmatpush1.msra.mxu0 0.0
    %529 = vmatprep.subr.mxu0 0.0
    %530 = vmatpush1.msra.mxu0 0.0
    %531 = vmatprep.subr.mxu0 0.0
    %532 = vmatpush1.msra.mxu0 0.0
    %533 = vmatprep.subr.mxu0 0.0
    %534 = vmatpush1.msra.mxu0 0.0
    %535 = vmatprep.subr.mxu0 0.0
    %536 = vmatpush1.msra.mxu0 0.0
    %537 = vmatprep.mubr.f32.mxu0 0.0
    %v538 = vand.u32 %v91, 4294901760
    %v539 = vsub.f32 %v91, %v538
    %v540 = vand.u32 %v539, 4294901760
    %541 = vmatmul.mubr.f32.gmra.mrb[0].mxu0 %v540
    %v542 = vpop.f32.mrb[0].mxu0
    %v543 = vadd.f32 %v454, %v542
    %v544 = vpop.f32.mrb[0].mxu0
    %545 = vdwg.mxu0
    %546 = vmatprep.subr.mxu0 0.0
    %v547 = vand.u32 %v92, 4294901760
    %v548 = vsub.f32 %v92, %v547
    %v549 = vand.u32 %v548, 4294901760
    %550 = vmatpush1.msra.mxu0 %v549
    %551 = vmatprep.subr.mxu0 0.0
    %v552 = vand.u32 %v93, 4294901760
    %v553 = vsub.f32 %v93, %v552
    %v554 = vand.u32 %v553, 4294901760
    %555 = vmatpush1.msra.mxu0 %v554
    %556 = vmatprep.subr.mxu0 0.0
    %v557 = vand.u32 %v94, 4294901760
    %v558 = vsub.f32 %v94, %v557
    %v559 = vand.u32 %v558, 4294901760
    %560 = vmatpush1.msra.mxu0 %v559
    %561 = vmatprep.subr.mxu0 0.0
    %v562 = vand.u32 %v95, 4294901760
    %v563 = vsub.f32 %v95, %v562
    %v564 = vand.u32 %v563, 4294901760
    %565 = vmatpush1.msra.mxu0 %v564
    %566 = vmatprep.subr.mxu0 0.0
    %v567 = vand.u32 %v96, 4294901760
    %v568 = vsub.f32 %v96, %v567
    %v569 = vand.u32 %v568, 4294901760
    %570 = vmatpush1.msra.mxu0 %v569
    %571 = vmatprep.subr.mxu0 0.0
    %v572 = vand.u32 %v97, 4294901760
    %v573 = vsub.f32 %v97, %v572
    %v574 = vand.u32 %v573, 4294901760
    %575 = vmatpush1.msra.mxu0 %v574
    %576 = vmatprep.subr.mxu0 0.0
    %v577 = vand.u32 %v98, 4294901760
    %v578 = vsub.f32 %v98, %v577
    %v579 = vand.u32 %v578, 4294901760
    %580 = vmatpush1.msra.mxu0 %v579
    %581 = vmatprep.subr.mxu0 0.0
    %v582 = vand.u32 %v99, 4294901760
    %v583 = vsub.f32 %v99, %v582
    %v584 = vand.u32 %v583, 4294901760
    %585 = vmatpush1.msra.mxu0 %v584
    %586 = vmatprep.subr.mxu0 0.0
    %v587 = vand.u32 %v100, 4294901760
    %v588 = vsub.f32 %v100, %v587
    %v589 = vand.u32 %v588, 4294901760
    %590 = vmatpush1.msra.mxu0 %v589
    %591 = vmatprep.subr.mxu0 0.0
    %v592 = vand.u32 %v101, 4294901760
    %v593 = vsub.f32 %v101, %v592
    %v594 = vand.u32 %v593, 4294901760
    %595 = vmatpush1.msra.mxu0 %v594
    %596 = vmatprep.subr.mxu0 0.0
    %v597 = vand.u32 %v102, 4294901760
    %v598 = vsub.f32 %v102, %v597
    %v599 = vand.u32 %v598, 4294901760
    %600 = vmatpush1.msra.mxu0 %v599
    %601 = vmatprep.subr.mxu0 0.0
    %v602 = vand.u32 %v103, 4294901760
    %v603 = vsub.f32 %v103, %v602
    %v604 = vand.u32 %v603, 4294901760
    %605 = vmatpush1.msra.mxu0 %v604
    %606 = vmatprep.subr.mxu0 0.0
    %v607 = vand.u32 %v104, 4294901760
    %v608 = vsub.f32 %v104, %v607
    %v609 = vand.u32 %v608, 4294901760
    %610 = vmatpush1.msra.mxu0 %v609
    %611 = vmatprep.subr.mxu0 0.0
    %v612 = vand.u32 %v105, 4294901760
    %v613 = vsub.f32 %v105, %v612
    %v614 = vand.u32 %v613, 4294901760
    %615 = vmatpush1.msra.mxu0 %v614
    %616 = vmatprep.subr.mxu0 0.0
    %v617 = vand.u32 %v106, 4294901760
    %v618 = vsub.f32 %v106, %v617
    %v619 = vand.u32 %v618, 4294901760
    %620 = vmatpush1.msra.mxu0 %v619
    %621 = vmatprep.subr.mxu0 0.0
    %v622 = vand.u32 %v107, 4294901760
    %v623 = vsub.f32 %v107, %v622
    %v624 = vand.u32 %v623, 4294901760
    %625 = vmatpush1.msra.mxu0 %v624
    %626 = vmatprep.subr.mxu0 0.0
    %627 = vmatpush1.msra.mxu0 0.0
    %628 = vmatprep.subr.mxu0 0.0
    %629 = vmatpush1.msra.mxu0 0.0
    %630 = vmatprep.subr.mxu0 0.0
    %631 = vmatpush1.msra.mxu0 0.0
    %632 = vmatprep.subr.mxu0 0.0
    %633 = vmatpush1.msra.mxu0 0.0
    %634 = vmatprep.subr.mxu0 0.0
    %635 = vmatpush1.msra.mxu0 0.0
    %636 = vmatprep.subr.mxu0 0.0
    %637 = vmatpush1.msra.mxu0 0.0
    %638 = vmatprep.subr.mxu0 0.0
    %639 = vmatpush1.msra.mxu0 0.0
    %640 = vmatprep.subr.mxu0 0.0
    %641 = vmatpush1.msra.mxu0 0.0
    %642 = vmatprep.subr.mxu0 0.0
    %643 = vmatpush1.msra.mxu0 0.0
    %644 = vmatprep.subr.mxu0 0.0
    %645 = vmatpush1.msra.mxu0 0.0
    %646 = vmatprep.subr.mxu0 0.0
    %647 = vmatpush1.msra.mxu0 0.0
    %648 = vmatprep.subr.mxu0 0.0
    %649 = vmatpush1.msra.mxu0 0.0
    %650 = vmatprep.subr.mxu0 0.0
    %651 = vmatpush1.msra.mxu0 0.0
    %652 = vmatprep.subr.mxu0 0.0
    %653 = vmatpush1.msra.mxu0 0.0
    %654 = vmatprep.subr.mxu0 0.0
    %655 = vmatpush1.msra.mxu0 0.0
    %656 = vmatprep.subr.mxu0 0.0
    %657 = vmatpush1.msra.mxu0 0.0
    %658 = vmatprep.mubr.f32.mxu0 0.0
    %v659 = vand.u32 %v91, 4294901760
    %660 = vmatmul.mubr.f32.gmra.mrb[0].mxu0 %v659
    %v661 = vpop.f32.mrb[0].mxu0
    %v662 = vadd.f32 %v543, %v661
    %v663 = vpop.f32.mrb[0].mxu0
    %664 = vdwg.mxu0
    %665 = vmatprep.subr.mxu0 0.0
    %v666 = vand.u32 %v92, 4294901760
    %667 = vmatpush1.msra.mxu0 %v666
    %668 = vmatprep.subr.mxu0 0.0
    %v669 = vand.u32 %v93, 4294901760
    %670 = vmatpush1.msra.mxu0 %v669
    %671 = vmatprep.subr.mxu0 0.0
    %v672 = vand.u32 %v94, 4294901760
    %673 = vmatpush1.msra.mxu0 %v672
    %674 = vmatprep.subr.mxu0 0.0
    %v675 = vand.u32 %v95, 4294901760
    %676 = vmatpush1.msra.mxu0 %v675
    %677 = vmatprep.subr.mxu0 0.0
    %v678 = vand.u32 %v96, 4294901760
    %679 = vmatpush1.msra.mxu0 %v678
    %680 = vmatprep.subr.mxu0 0.0
    %v681 = vand.u32 %v97, 4294901760
    %682 = vmatpush1.msra.mxu0 %v681
    %683 = vmatprep.subr.mxu0 0.0
    %v684 = vand.u32 %v98, 4294901760
    %685 = vmatpush1.msra.mxu0 %v684
    %686 = vmatprep.subr.mxu0 0.0
    %v687 = vand.u32 %v99, 4294901760
    %688 = vmatpush1.msra.mxu0 %v687
    %689 = vmatprep.subr.mxu0 0.0
    %v690 = vand.u32 %v100, 4294901760
    %691 = vmatpush1.msra.mxu0 %v690
    %692 = vmatprep.subr.mxu0 0.0
    %v693 = vand.u32 %v101, 4294901760
    %694 = vmatpush1.msra.mxu0 %v693
    %695 = vmatprep.subr.mxu0 0.0
    %v696 = vand.u32 %v102, 4294901760
    %697 = vmatpush1.msra.mxu0 %v696
    %698 = vmatprep.subr.mxu0 0.0
    %v699 = vand.u32 %v103, 4294901760
    %700 = vmatpush1.msra.mxu0 %v699
    %701 = vmatprep.subr.mxu0 0.0
    %v702 = vand.u32 %v104, 4294901760
    %703 = vmatpush1.msra.mxu0 %v702
    %704 = vmatprep.subr.mxu0 0.0
    %v705 = vand.u32 %v105, 4294901760
    %706 = vmatpush1.msra.mxu0 %v705
    %707 = vmatprep.subr.mxu0 0.0
    %v708 = vand.u32 %v106, 4294901760
    %709 = vmatpush1.msra.mxu0 %v708
    %710 = vmatprep.subr.mxu0 0.0
    %v711 = vand.u32 %v107, 4294901760
    %712 = vmatpush1.msra.mxu0 %v711
    %713 = vmatprep.subr.mxu0 0.0
    %714 = vmatpush1.msra.mxu0 0.0
    %715 = vmatprep.subr.mxu0 0.0
    %716 = vmatpush1.msra.mxu0 0.0
    %717 = vmatprep.subr.mxu0 0.0
    %718 = vmatpush1.msra.mxu0 0.0
    %719 = vmatprep.subr.mxu0 0.0
    %720 = vmatpush1.msra.mxu0 0.0
    %721 = vmatprep.subr.mxu0 0.0
    %722 = vmatpush1.msra.mxu0 0.0
    %723 = vmatprep.subr.mxu0 0.0
    %724 = vmatpush1.msra.mxu0 0.0
    %725 = vmatprep.subr.mxu0 0.0
    %726 = vmatpush1.msra.mxu0 0.0
    %727 = vmatprep.subr.mxu0 0.0
    %728 = vmatpush1.msra.mxu0 0.0
    %729 = vmatprep.subr.mxu0 0.0
    %730 = vmatpush1.msra.mxu0 0.0
    %731 = vmatprep.subr.mxu0 0.0
    %732 = vmatpush1.msra.mxu0 0.0
    %733 = vmatprep.subr.mxu0 0.0
    %734 = vmatpush1.msra.mxu0 0.0
    %735 = vmatprep.subr.mxu0 0.0
    %736 = vmatpush1.msra.mxu0 0.0
    %737 = vmatprep.subr.mxu0 0.0
    %738 = vmatpush1.msra.mxu0 0.0
    %739 = vmatprep.subr.mxu0 0.0
    %740 = vmatpush1.msra.mxu0 0.0
    %741 = vmatprep.subr.mxu0 0.0
    %742 = vmatpush1.msra.mxu0 0.0
    %743 = vmatprep.subr.mxu0 0.0
    %744 = vmatpush1.msra.mxu0 0.0
    %745 = vmatprep.mubr.f32.mxu0 0.0
    %v746 = vand.u32 %v91, 4294901760
    %747 = vmatmul.mubr.f32.gmra.mrb[0].mxu0 %v746
    %v748 = vpop.f32.mrb[0].mxu0
    %v749 = vadd.f32 %v662, %v748
    %v750 = vpop.f32.mrb[0].mxu0
    %751 = vdwg.mxu0
    %v752 = vcvt.s32.f32 %v86
    %vm753 = vcmask 130048
    %v755 = vsel %vm753, %v752, 0
    %757 = vmatprep.subr.mxu0 0.0
    %v758 = vand.u32 %v108, 4294901760
    %759 = vmatpush1.msra.mxu0 %v758
    %760 = vmatprep.subr.mxu0 0.0
    %v761 = vand.u32 %v109, 4294901760
    %762 = vmatpush1.msra.mxu0 %v761
    %763 = vmatprep.subr.mxu0 0.0
    %764 = vmatpush1.msra.mxu0 0.0
    %765 = vmatprep.subr.mxu0 0.0
    %766 = vmatpush1.msra.mxu0 0.0
    %767 = vmatprep.subr.mxu0 0.0
    %768 = vmatpush1.msra.mxu0 0.0
    %769 = vmatprep.subr.mxu0 0.0
    %770 = vmatpush1.msra.mxu0 0.0
    %771 = vmatprep.subr.mxu0 0.0
    %772 = vmatpush1.msra.mxu0 0.0
    %773 = vmatprep.subr.mxu0 0.0
    %774 = vmatpush1.msra.mxu0 0.0
    %775 = vmatprep.subr.mxu0 0.0
    %776 = vmatpush1.msra.mxu0 0.0
    %777 = vmatprep.subr.mxu0 0.0
    %778 = vmatpush1.msra.mxu0 0.0
    %779 = vmatprep.subr.mxu0 0.0
    %780 = vmatpush1.msra.mxu0 0.0
    %781 = vmatprep.subr.mxu0 0.0
    %782 = vmatpush1.msra.mxu0 0.0
    %783 = vmatprep.subr.mxu0 0.0
    %784 = vmatpush1.msra.mxu0 0.0
    %785 = vmatprep.subr.mxu0 0.0
    %786 = vmatpush1.msra.mxu0 0.0
    %787 = vmatprep.subr.mxu0 0.0
    %788 = vmatpush1.msra.mxu0 0.0
    %789 = vmatprep.subr.mxu0 0.0
    %790 = vmatpush1.msra.mxu0 0.0
    %791 = vmatprep.subr.mxu0 0.0
    %792 = vmatpush1.msra.mxu0 0.0
    %793 = vmatprep.subr.mxu0 0.0
    %794 = vmatpush1.msra.mxu0 0.0
    %795 = vmatprep.subr.mxu0 0.0
    %796 = vmatpush1.msra.mxu0 0.0
    %797 = vmatprep.subr.mxu0 0.0
    %798 = vmatpush1.msra.mxu0 0.0
    %799 = vmatprep.subr.mxu0 0.0
    %800 = vmatpush1.msra.mxu0 0.0
    %801 = vmatprep.subr.mxu0 0.0
    %802 = vmatpush1.msra.mxu0 0.0
    %803 = vmatprep.subr.mxu0 0.0
    %804 = vmatpush1.msra.mxu0 0.0
    %805 = vmatprep.subr.mxu0 0.0
    %806 = vmatpush1.msra.mxu0 0.0
    %807 = vmatprep.subr.mxu0 0.0
    %808 = vmatpush1.msra.mxu0 0.0
    %809 = vmatprep.subr.mxu0 0.0
    %810 = vmatpush1.msra.mxu0 0.0
    %811 = vmatprep.subr.mxu0 0.0
    %812 = vmatpush1.msra.mxu0 0.0
    %813 = vmatprep.subr.mxu0 0.0
    %814 = vmatpush1.msra.mxu0 0.0
    %815 = vmatprep.subr.mxu0 0.0
    %816 = vmatpush1.msra.mxu0 0.0
    %817 = vmatprep.subr.mxu0 0.0
    %818 = vmatpush1.msra.mxu0 0.0
    %819 = vmatprep.subr.mxu0 0.0
    %820 = vmatpush1.msra.mxu0 0.0
    %821 = vmatprep.subr.mxu0 0.0
    %822 = vmatpush1.msra.mxu0 0.0
    %823 = vmatprep.mubr.f32.mxu0 0.0
    %v824 = vand.u32 %v755, 4294901760
    %v825 = vsub.f32 %v755, %v824
    %v826 = vand.u32 %v825, 4294901760
    %v827 = vsub.f32 %v825, %v826
    %v828 = vand.u32 %v827, 4294901760
    %829 = vmatmul.mubr.f32.gmra.mrb[0].mxu0 %v828
    %v830 = vpop.f32.mrb[0].mxu0
    %v831 = vadd.f32 0.0, %v830
    %v832 = vpop.f32.mrb[0].mxu0
    %833 = vdwg.mxu0
    %834 = vmatprep.subr.mxu0 0.0
    %v835 = vand.u32 %v108, 4294901760
    %v836 = vsub.f32 %v108, %v835
    %v837 = vand.u32 %v836, 4294901760
    %v838 = vsub.f32 %v836, %v837
    %v839 = vand.u32 %v838, 4294901760
    %840 = vmatpush1.msra.mxu0 %v839
    %841 = vmatprep.subr.mxu0 0.0
    %v842 = vand.u32 %v109, 4294901760
    %v843 = vsub.f32 %v109, %v842
    %v844 = vand.u32 %v843, 4294901760
    %v845 = vsub.f32 %v843, %v844
    %v846 = vand.u32 %v845, 4294901760
    %847 = vmatpush1.msra.mxu0 %v846
    %848 = vmatprep.subr.mxu0 0.0
    %849 = vmatpush1.msra.mxu0 0.0
    %850 = vmatprep.subr.mxu0 0.0
    %851 = vmatpush1.msra.mxu0 0.0
    %852 = vmatprep.subr.mxu0 0.0
    %853 = vmatpush1.msra.mxu0 0.0
    %854 = vmatprep.subr.mxu0 0.0
    %855 = vmatpush1.msra.mxu0 0.0
    %856 = vmatprep.subr.mxu0 0.0
    %857 = vmatpush1.msra.mxu0 0.0
    %858 = vmatprep.subr.mxu0 0.0
    %859 = vmatpush1.msra.mxu0 0.0
    %860 = vmatprep.subr.mxu0 0.0
    %861 = vmatpush1.msra.mxu0 0.0
    %862 = vmatprep.subr.mxu0 0.0
    %863 = vmatpush1.msra.mxu0 0.0
    %864 = vmatprep.subr.mxu0 0.0
    %865 = vmatpush1.msra.mxu0 0.0
    %866 = vmatprep.subr.mxu0 0.0
    %867 = vmatpush1.msra.mxu0 0.0
    %868 = vmatprep.subr.mxu0 0.0
    %869 = vmatpush1.msra.mxu0 0.0
    %870 = vmatprep.subr.mxu0 0.0
    %871 = vmatpush1.msra.mxu0 0.0
    %872 = vmatprep.subr.mxu0 0.0
    %873 = vmatpush1.msra.mxu0 0.0
    %874 = vmatprep.subr.mxu0 0.0
    %875 = vmatpush1.msra.mxu0 0.0
    %876 = vmatprep.subr.mxu0 0.0
    %877 = vmatpush1.msra.mxu0 0.0
    %878 = vmatprep.subr.mxu0 0.0
    %879 = vmatpush1.msra.mxu0 0.0
    %880 = vmatprep.subr.mxu0 0.0
    %881 = vmatpush1.msra.mxu0 0.0
    %882 = vmatprep.subr.mxu0 0.0
    %883 = vmatpush1.msra.mxu0 0.0
    %884 = vmatprep.subr.mxu0 0.0
    %885 = vmatpush1.msra.mxu0 0.0
    %886 = vmatprep.subr.mxu0 0.0
    %887 = vmatpush1.msra.mxu0 0.0
    %888 = vmatprep.subr.mxu0 0.0
    %889 = vmatpush1.msra.mxu0 0.0
    %890 = vmatprep.subr.mxu0 0.0
    %891 = vmatpush1.msra.mxu0 0.0
    %892 = vmatprep.subr.mxu0 0.0
    %893 = vmatpush1.msra.mxu0 0.0
    %894 = vmatprep.subr.mxu0 0.0
    %895 = vmatpush1.msra.mxu0 0.0
    %896 = vmatprep.subr.mxu0 0.0
    %897 = vmatpush1.msra.mxu0 0.0
    %898 = vmatprep.subr.mxu0 0.0
    %899 = vmatpush1.msra.mxu0 0.0
    %900 = vmatprep.subr.mxu0 0.0
    %901 = vmatpush1.msra.mxu0 0.0
    %902 = vmatprep.subr.mxu0 0.0
    %903 = vmatpush1.msra.mxu0 0.0
    %904 = vmatprep.subr.mxu0 0.0
    %905 = vmatpush1.msra.mxu0 0.0
    %906 = vmatprep.subr.mxu0 0.0
    %907 = vmatpush1.msra.mxu0 0.0
    %908 = vmatprep.mubr.f32.mxu0 0.0
    %v909 = vand.u32 %v755, 4294901760
    %910 = vmatmul.mubr.f32.gmra.mrb[0].mxu0 %v909
    %v911 = vpop.f32.mrb[0].mxu0
    %v912 = vadd.f32 %v831, %v911
    %v913 = vpop.f32.mrb[0].mxu0
    %914 = vdwg.mxu0
    %915 = vmatprep.subr.mxu0 0.0
    %v916 = vand.u32 %v108, 4294901760
    %v917 = vsub.f32 %v108, %v916
    %918 = vmatpush1.msra.mxu0 %v917
    %919 = vmatprep.subr.mxu0 0.0
    %v920 = vand.u32 %v109, 4294901760
    %v921 = vsub.f32 %v109, %v920
    %922 = vmatpush1.msra.mxu0 %v921
    %923 = vmatprep.subr.mxu0 0.0
    %924 = vmatpush1.msra.mxu0 0.0
    %925 = vmatprep.subr.mxu0 0.0
    %926 = vmatpush1.msra.mxu0 0.0
    %927 = vmatprep.subr.mxu0 0.0
    %928 = vmatpush1.msra.mxu0 0.0
    %929 = vmatprep.subr.mxu0 0.0
    %930 = vmatpush1.msra.mxu0 0.0
    %931 = vmatprep.subr.mxu0 0.0
    %932 = vmatpush1.msra.mxu0 0.0
    %933 = vmatprep.subr.mxu0 0.0
    %934 = vmatpush1.msra.mxu0 0.0
    %935 = vmatprep.subr.mxu0 0.0
    %936 = vmatpush1.msra.mxu0 0.0
    %937 = vmatprep.subr.mxu0 0.0
    %938 = vmatpush1.msra.mxu0 0.0
    %939 = vmatprep.subr.mxu0 0.0
    %940 = vmatpush1.msra.mxu0 0.0
    %941 = vmatprep.subr.mxu0 0.0
    %942 = vmatpush1.msra.mxu0 0.0
    %943 = vmatprep.subr.mxu0 0.0
    %944 = vmatpush1.msra.mxu0 0.0
    %945 = vmatprep.subr.mxu0 0.0
    %946 = vmatpush1.msra.mxu0 0.0
    %947 = vmatprep.subr.mxu0 0.0
    %948 = vmatpush1.msra.mxu0 0.0
    %949 = vmatprep.subr.mxu0 0.0
    %950 = vmatpush1.msra.mxu0 0.0
    %951 = vmatprep.subr.mxu0 0.0
    %952 = vmatpush1.msra.mxu0 0.0
    %953 = vmatprep.subr.mxu0 0.0
    %954 = vmatpush1.msra.mxu0 0.0
    %955 = vmatprep.subr.mxu0 0.0
    %956 = vmatpush1.msra.mxu0 0.0
    %957 = vmatprep.subr.mxu0 0.0
    %958 = vmatpush1.msra.mxu0 0.0
    %959 = vmatprep.subr.mxu0 0.0
    %960 = vmatpush1.msra.mxu0 0.0
    %961 = vmatprep.subr.mxu0 0.0
    %962 = vmatpush1.msra.mxu0 0.0
    %963 = vmatprep.subr.mxu0 0.0
    %964 = vmatpush1.msra.mxu0 0.0
    %965 = vmatprep.subr.mxu0 0.0
    %966 = vmatpush1.msra.mxu0 0.0
    %967 = vmatprep.subr.mxu0 0.0
    %968 = vmatpush1.msra.mxu0 0.0
    %969 = vmatprep.subr.mxu0 0.0
    %970 = vmatpush1.msra.mxu0 0.0
    %971 = vmatprep.subr.mxu0 0.0
    %972 = vmatpush1.msra.mxu0 0.0
    %973 = vmatprep.subr.mxu0 0.0
    %974 = vmatpush1.msra.mxu0 0.0
    %975 = vmatprep.subr.mxu0 0.0
    %976 = vmatpush1.msra.mxu0 0.0
    %977 = vmatprep.subr.mxu0 0.0
    %978 = vmatpush1.msra.mxu0 0.0
    %979 = vmatprep.subr.mxu0 0.0
    %980 = vmatpush1.msra.mxu0 0.0
    %981 = vmatprep.subr.mxu0 0.0
    %982 = vmatpush1.msra.mxu0 0.0
    %983 = vmatprep.mubr.f32.mxu0 0.0
    %v984 = vand.u32 %v755, 4294901760
    %v985 = vsub.f32 %v755, %v984
    %986 = vmatmul.mubr.f32.gmra.mrb[0].mxu0 %v985
    %v987 = vpop.f32.mrb[0].mxu0
    %v988 = vadd.f32 %v912, %v987
    %v989 = vpop.f32.mrb[0].mxu0
    %990 = vdwg.mxu0
    %991 = vmatprep.subr.mxu0 0.0
    %v992 = vand.u32 %v108, 4294901760
    %993 = vmatpush1.msra.mxu0 %v992
    %994 = vmatprep.subr.mxu0 0.0
    %v995 = vand.u32 %v109, 4294901760
    %996 = vmatpush1.msra.mxu0 %v995
    %997 = vmatprep.subr.mxu0 0.0
    %998 = vmatpush1.msra.mxu0 0.0
    %999 = vmatprep.subr.mxu0 0.0
    %1000 = vmatpush1.msra.mxu0 0.0
    %1001 = vmatprep.subr.mxu0 0.0
    %1002 = vmatpush1.msra.mxu0 0.0
    %1003 = vmatprep.subr.mxu0 0.0
    %1004 = vmatpush1.msra.mxu0 0.0
    %1005 = vmatprep.subr.mxu0 0.0
    %1006 = vmatpush1.msra.mxu0 0.0
    %1007 = vmatprep.subr.mxu0 0.0
    %1008 = vmatpush1.msra.mxu0 0.0
    %1009 = vmatprep.subr.mxu0 0.0
    %1010 = vmatpush1.msra.mxu0 0.0
    %1011 = vmatprep.subr.mxu0 0.0
    %1012 = vmatpush1.msra.mxu0 0.0
    %1013 = vmatprep.subr.mxu0 0.0
    %1014 = vmatpush1.msra.mxu0 0.0
    %1015 = vmatprep.subr.mxu0 0.0
    %1016 = vmatpush1.msra.mxu0 0.0
    %1017 = vmatprep.subr.mxu0 0.0
    %1018 = vmatpush1.msra.mxu0 0.0
    %1019 = vmatprep.subr.mxu0 0.0
    %1020 = vmatpush1.msra.mxu0 0.0
    %1021 = vmatprep.subr.mxu0 0.0
    %1022 = vmatpush1.msra.mxu0 0.0
    %1023 = vmatprep.subr.mxu0 0.0
    %1024 = vmatpush1.msra.mxu0 0.0
    %1025 = vmatprep.subr.mxu0 0.0
    %1026 = vmatpush1.msra.mxu0 0.0
    %1027 = vmatprep.subr.mxu0 0.0
    %1028 = vmatpush1.msra.mxu0 0.0
    %1029 = vmatprep.subr.mxu0 0.0
    %1030 = vmatpush1.msra.mxu0 0.0
    %1031 = vmatprep.subr.mxu0 0.0
    %1032 = vmatpush1.msra.mxu0 0.0
    %1033 = vmatprep.subr.mxu0 0.0
    %1034 = vmatpush1.msra.mxu0 0.0
    %1035 = vmatprep.subr.mxu0 0.0
    %1036 = vmatpush1.msra.mxu0 0.0
    %1037 = vmatprep.subr.mxu0 0.0
    %1038 = vmatpush1.msra.mxu0 0.0
    %1039 = vmatprep.subr.mxu0 0.0
    %1040 = vmatpush1.msra.mxu0 0.0
    %1041 = vmatprep.subr.mxu0 0.0
    %1042 = vmatpush1.msra.mxu0 0.0
    %1043 = vmatprep.subr.mxu0 0.0
    %1044 = vmatpush1.msra.mxu0 0.0
    %1045 = vmatprep.subr.mxu0 0.0
    %1046 = vmatpush1.msra.mxu0 0.0
    %1047 = vmatprep.subr.mxu0 0.0
    %1048 = vmatpush1.msra.mxu0 0.0
    %1049 = vmatprep.subr.mxu0 0.0
    %1050 = vmatpush1.msra.mxu0 0.0
    %1051 = vmatprep.subr.mxu0 0.0
    %1052 = vmatpush1.msra.mxu0 0.0
    %1053 = vmatprep.subr.mxu0 0.0
    %1054 = vmatpush1.msra.mxu0 0.0
    %1055 = vmatprep.subr.mxu0 0.0
    %1056 = vmatpush1.msra.mxu0 0.0
    %1057 = vmatprep.mubr.f32.mxu0 0.0
    %v1058 = vand.u32 %v755, 4294901760
    %v1059 = vsub.f32 %v755, %v1058
    %v1060 = vand.u32 %v1059, 4294901760
    %1061 = vmatmul.mubr.f32.gmra.mrb[0].mxu0 %v1060
    %v1062 = vpop.f32.mrb[0].mxu0
    %v1063 = vadd.f32 %v988, %v1062
    %v1064 = vpop.f32.mrb[0].mxu0
    %1065 = vdwg.mxu0
    %1066 = vmatprep.subr.mxu0 0.0
    %v1067 = vand.u32 %v108, 4294901760
    %v1068 = vsub.f32 %v108, %v1067
    %v1069 = vand.u32 %v1068, 4294901760
    %1070 = vmatpush1.msra.mxu0 %v1069
    %1071 = vmatprep.subr.mxu0 0.0
    %v1072 = vand.u32 %v109, 4294901760
    %v1073 = vsub.f32 %v109, %v1072
    %v1074 = vand.u32 %v1073, 4294901760
    %1075 = vmatpush1.msra.mxu0 %v1074
    %1076 = vmatprep.subr.mxu0 0.0
    %1077 = vmatpush1.msra.mxu0 0.0
    %1078 = vmatprep.subr.mxu0 0.0
    %1079 = vmatpush1.msra.mxu0 0.0
    %1080 = vmatprep.subr.mxu0 0.0
    %1081 = vmatpush1.msra.mxu0 0.0
    %1082 = vmatprep.subr.mxu0 0.0
    %1083 = vmatpush1.msra.mxu0 0.0
    %1084 = vmatprep.subr.mxu0 0.0
    %1085 = vmatpush1.msra.mxu0 0.0
    %1086 = vmatprep.subr.mxu0 0.0
    %1087 = vmatpush1.msra.mxu0 0.0
    %1088 = vmatprep.subr.mxu0 0.0
    %1089 = vmatpush1.msra.mxu0 0.0
    %1090 = vmatprep.subr.mxu0 0.0
    %1091 = vmatpush1.msra.mxu0 0.0
    %1092 = vmatprep.subr.mxu0 0.0
    %1093 = vmatpush1.msra.mxu0 0.0
    %1094 = vmatprep.subr.mxu0 0.0
    %1095 = vmatpush1.msra.mxu0 0.0
    %1096 = vmatprep.subr.mxu0 0.0
    %1097 = vmatpush1.msra.mxu0 0.0
    %1098 = vmatprep.subr.mxu0 0.0
    %1099 = vmatpush1.msra.mxu0 0.0
    %1100 = vmatprep.subr.mxu0 0.0
    %1101 = vmatpush1.msra.mxu0 0.0
    %1102 = vmatprep.subr.mxu0 0.0
    %1103 = vmatpush1.msra.mxu0 0.0
    %1104 = vmatprep.subr.mxu0 0.0
    %1105 = vmatpush1.msra.mxu0 0.0
    %1106 = vmatprep.subr.mxu0 0.0
    %1107 = vmatpush1.msra.mxu0 0.0
    %1108 = vmatprep.subr.mxu0 0.0
    %1109 = vmatpush1.msra.mxu0 0.0
    %1110 = vmatprep.subr.mxu0 0.0
    %1111 = vmatpush1.msra.mxu0 0.0
    %1112 = vmatprep.subr.mxu0 0.0
    %1113 = vmatpush1.msra.mxu0 0.0
    %1114 = vmatprep.subr.mxu0 0.0
    %1115 = vmatpush1.msra.mxu0 0.0
    %1116 = vmatprep.subr.mxu0 0.0
    %1117 = vmatpush1.msra.mxu0 0.0
    %1118 = vmatprep.subr.mxu0 0.0
    %1119 = vmatpush1.msra.mxu0 0.0
    %1120 = vmatprep.subr.mxu0 0.0
    %1121 = vmatpush1.msra.mxu0 0.0
    %1122 = vmatprep.subr.mxu0 0.0
    %1123 = vmatpush1.msra.mxu0 0.0
    %1124 = vmatprep.subr.mxu0 0.0
    %1125 = vmatpush1.msra.mxu0 0.0
    %1126 = vmatprep.subr.mxu0 0.0
    %1127 = vmatpush1.msra.mxu0 0.0
    %1128 = vmatprep.subr.mxu0 0.0
    %1129 = vmatpush1.msra.mxu0 0.0
    %1130 = vmatprep.subr.mxu0 0.0
    %1131 = vmatpush1.msra.mxu0 0.0
    %1132 = vmatprep.subr.mxu0 0.0
    %1133 = vmatpush1.msra.mxu0 0.0
    %1134 = vmatprep.subr.mxu0 0.0
    %1135 = vmatpush1.msra.mxu0 0.0
    %1136 = vmatprep.mubr.f32.mxu0 0.0
    %v1137 = vand.u32 %v755, 4294901760
    %1138 = vmatmul.mubr.f32.gmra.mrb[0].mxu0 %v1137
    %v1139 = vpop.f32.mrb[0].mxu0
    %v1140 = vadd.f32 %v1063, %v1139
    %v1141 = vpop.f32.mrb[0].mxu0
    %1142 = vdwg.mxu0
    %1143 = vmatprep.subr.mxu0 0.0
    %v1144 = vand.u32 %v108, 4294901760
    %1145 = vmatpush1.msra.mxu0 %v1144
    %1146 = vmatprep.subr.mxu0 0.0
    %v1147 = vand.u32 %v109, 4294901760
    %1148 = vmatpush1.msra.mxu0 %v1147
    %1149 = vmatprep.subr.mxu0 0.0
    %1150 = vmatpush1.msra.mxu0 0.0
    %1151 = vmatprep.subr.mxu0 0.0
    %1152 = vmatpush1.msra.mxu0 0.0
    %1153 = vmatprep.subr.mxu0 0.0
    %1154 = vmatpush1.msra.mxu0 0.0
    %1155 = vmatprep.subr.mxu0 0.0
    %1156 = vmatpush1.msra.mxu0 0.0
    %1157 = vmatprep.subr.mxu0 0.0
    %1158 = vmatpush1.msra.mxu0 0.0
    %1159 = vmatprep.subr.mxu0 0.0
    %1160 = vmatpush1.msra.mxu0 0.0
    %1161 = vmatprep.subr.mxu0 0.0
    %1162 = vmatpush1.msra.mxu0 0.0
    %1163 = vmatprep.subr.mxu0 0.0
    %1164 = vmatpush1.msra.mxu0 0.0
    %1165 = vmatprep.subr.mxu0 0.0
    %1166 = vmatpush1.msra.mxu0 0.0
    %1167 = vmatprep.subr.mxu0 0.0
    %1168 = vmatpush1.msra.mxu0 0.0
    %1169 = vmatprep.subr.mxu0 0.0
    %1170 = vmatpush1.msra.mxu0 0.0
    %1171 = vmatprep.subr.mxu0 0.0
    %1172 = vmatpush1.msra.mxu0 0.0
    %1173 = vmatprep.subr.mxu0 0.0
    %1174 = vmatpush1.msra.mxu0 0.0
    %1175 = vmatprep.subr.mxu0 0.0
    %1176 = vmatpush1.msra.mxu0 0.0
    %1177 = vmatprep.subr.mxu0 0.0
    %1178 = vmatpush1.msra.mxu0 0.0
    %1179 = vmatprep.subr.mxu0 0.0
    %1180 = vmatpush1.msra.mxu0 0.0
    %1181 = vmatprep.subr.mxu0 0.0
    %1182 = vmatpush1.msra.mxu0 0.0
    %1183 = vmatprep.subr.mxu0 0.0
    %1184 = vmatpush1.msra.mxu0 0.0
    %1185 = vmatprep.subr.mxu0 0.0
    %1186 = vmatpush1.msra.mxu0 0.0
    %1187 = vmatprep.subr.mxu0 0.0
    %1188 = vmatpush1.msra.mxu0 0.0
    %1189 = vmatprep.subr.mxu0 0.0
    %1190 = vmatpush1.msra.mxu0 0.0
    %1191 = vmatprep.subr.mxu0 0.0
    %1192 = vmatpush1.msra.mxu0 0.0
    %1193 = vmatprep.subr.mxu0 0.0
    %1194 = vmatpush1.msra.mxu0 0.0
    %1195 = vmatprep.subr.mxu0 0.0
    %1196 = vmatpush1.msra.mxu0 0.0
    %1197 = vmatprep.subr.mxu0 0.0
    %1198 = vmatpush1.msra.mxu0 0.0
    %1199 = vmatprep.subr.mxu0 0.0
    %1200 = vmatpush1.msra.mxu0 0.0
    %1201 = vmatprep.subr.mxu0 0.0
    %1202 = vmatpush1.msra.mxu0 0.0
    %1203 = vmatprep.subr.mxu0 0.0
    %1204 = vmatpush1.msra.mxu0 0.0
    %1205 = vmatprep.subr.mxu0 0.0
    %1206 = vmatpush1.msra.mxu0 0.0
    %1207 = vmatprep.subr.mxu0 0.0
    %1208 = vmatpush1.msra.mxu0 0.0
    %1209 = vmatprep.mubr.f32.mxu0 0.0
    %v1210 = vand.u32 %v755, 4294901760
    %1211 = vmatmul.mubr.f32.gmra.mrb[0].mxu0 %v1210
    %v1212 = vpop.f32.mrb[0].mxu0
    %v1213 = vadd.f32 %v1140, %v1212
    %v1214 = vpop.f32.mrb[0].mxu0
    %1215 = vdwg.mxu0
    %v1217 = vlaneseq
    %v1218 = vshrl.u32 %v1217, 7
    %v1219 = vsub.s32 0, %v1218
    %v1220 = vrot.slane %v110, %v1219
    %vm1222 = vcmp.eq.f32.partialorder %v1213, %v1220
    %v1223 = vsel %vm1222, %v85, 0.0
    %1224 = vmatprep.subr.mxu0 0.0
    %v1225 = vand.u32 %v92, 4294901760
    %1226 = vmatpush1.msra.mxu0 %v1225
    %1227 = vmatprep.subr.mxu0 0.0
    %v1228 = vand.u32 %v93, 4294901760
    %1229 = vmatpush1.msra.mxu0 %v1228
    %1230 = vmatprep.subr.mxu0 0.0
    %v1231 = vand.u32 %v94, 4294901760
    %1232 = vmatpush1.msra.mxu0 %v1231
    %1233 = vmatprep.subr.mxu0 0.0
    %v1234 = vand.u32 %v95, 4294901760
    %1235 = vmatpush1.msra.mxu0 %v1234
    %1236 = vmatprep.subr.mxu0 0.0
    %v1237 = vand.u32 %v96, 4294901760
    %1238 = vmatpush1.msra.mxu0 %v1237
    %1239 = vmatprep.subr.mxu0 0.0
    %v1240 = vand.u32 %v97, 4294901760
    %1241 = vmatpush1.msra.mxu0 %v1240
    %1242 = vmatprep.subr.mxu0 0.0
    %v1243 = vand.u32 %v98, 4294901760
    %1244 = vmatpush1.msra.mxu0 %v1243
    %1245 = vmatprep.subr.mxu0 0.0
    %v1246 = vand.u32 %v99, 4294901760
    %1247 = vmatpush1.msra.mxu0 %v1246
    %1248 = vmatprep.subr.mxu0 0.0
    %v1249 = vand.u32 %v100, 4294901760
    %1250 = vmatpush1.msra.mxu0 %v1249
    %1251 = vmatprep.subr.mxu0 0.0
    %v1252 = vand.u32 %v101, 4294901760
    %1253 = vmatpush1.msra.mxu0 %v1252
    %1254 = vmatprep.subr.mxu0 0.0
    %v1255 = vand.u32 %v102, 4294901760
    %1256 = vmatpush1.msra.mxu0 %v1255
    %1257 = vmatprep.subr.mxu0 0.0
    %v1258 = vand.u32 %v103, 4294901760
    %1259 = vmatpush1.msra.mxu0 %v1258
    %1260 = vmatprep.subr.mxu0 0.0
    %v1261 = vand.u32 %v104, 4294901760
    %1262 = vmatpush1.msra.mxu0 %v1261
    %1263 = vmatprep.subr.mxu0 0.0
    %v1264 = vand.u32 %v105, 4294901760
    %1265 = vmatpush1.msra.mxu0 %v1264
    %1266 = vmatprep.subr.mxu0 0.0
    %v1267 = vand.u32 %v106, 4294901760
    %1268 = vmatpush1.msra.mxu0 %v1267
    %1269 = vmatprep.subr.mxu0 0.0
    %v1270 = vand.u32 %v107, 4294901760
    %1271 = vmatpush1.msra.mxu0 %v1270
    %1272 = vmatprep.subr.mxu0 0.0
    %1273 = vmatpush1.msra.mxu0 0.0
    %1274 = vmatprep.subr.mxu0 0.0
    %1275 = vmatpush1.msra.mxu0 0.0
    %1276 = vmatprep.subr.mxu0 0.0
    %1277 = vmatpush1.msra.mxu0 0.0
    %1278 = vmatprep.subr.mxu0 0.0
    %1279 = vmatpush1.msra.mxu0 0.0
    %1280 = vmatprep.subr.mxu0 0.0
    %1281 = vmatpush1.msra.mxu0 0.0
    %1282 = vmatprep.subr.mxu0 0.0
    %1283 = vmatpush1.msra.mxu0 0.0
    %1284 = vmatprep.subr.mxu0 0.0
    %1285 = vmatpush1.msra.mxu0 0.0
    %1286 = vmatprep.subr.mxu0 0.0
    %1287 = vmatpush1.msra.mxu0 0.0
    %1288 = vmatprep.subr.mxu0 0.0
    %1289 = vmatpush1.msra.mxu0 0.0
    %1290 = vmatprep.subr.mxu0 0.0
    %1291 = vmatpush1.msra.mxu0 0.0
    %1292 = vmatprep.subr.mxu0 0.0
    %1293 = vmatpush1.msra.mxu0 0.0
    %1294 = vmatprep.subr.mxu0 0.0
    %1295 = vmatpush1.msra.mxu0 0.0
    %1296 = vmatprep.subr.mxu0 0.0
    %1297 = vmatpush1.msra.mxu0 0.0
    %1298 = vmatprep.subr.mxu0 0.0
    %1299 = vmatpush1.msra.mxu0 0.0
    %1300 = vmatprep.subr.mxu0 0.0
    %1301 = vmatpush1.msra.mxu0 0.0
    %1302 = vmatprep.subr.mxu0 0.0
    %1303 = vmatpush1.msra.mxu0 0.0
    %1304 = vmatprep.mubr.f32.mxu0 0.0
    %v1305 = vand.u32 %v1223, 4294901760
    %v1306 = vsub.f32 %v1223, %v1305
    %v1307 = vand.u32 %v1306, 4294901760
    %v1308 = vsub.f32 %v1306, %v1307
    %v1309 = vand.u32 %v1308, 4294901760
    %1310 = vmatmul.mubr.f32.gmra.mrb[0].mxu0 %v1309
    %v1311 = vpop.f32.mrb[0].mxu0
    %v1312 = vadd.f32 0.0, %v1311
    %v1313 = vpop.f32.mrb[0].mxu0
    %1314 = vdwg.mxu0
    %1315 = vmatprep.subr.mxu0 0.0
    %v1316 = vand.u32 %v92, 4294901760
    %v1317 = vsub.f32 %v92, %v1316
    %v1318 = vand.u32 %v1317, 4294901760
    %v1319 = vsub.f32 %v1317, %v1318
    %v1320 = vand.u32 %v1319, 4294901760
    %1321 = vmatpush1.msra.mxu0 %v1320
    %1322 = vmatprep.subr.mxu0 0.0
    %v1323 = vand.u32 %v93, 4294901760
    %v1324 = vsub.f32 %v93, %v1323
    %v1325 = vand.u32 %v1324, 4294901760
    %v1326 = vsub.f32 %v1324, %v1325
    %v1327 = vand.u32 %v1326, 4294901760
    %1328 = vmatpush1.msra.mxu0 %v1327
    %1329 = vmatprep.subr.mxu0 0.0
    %v1330 = vand.u32 %v94, 4294901760
    %v1331 = vsub.f32 %v94, %v1330
    %v1332 = vand.u32 %v1331, 4294901760
    %v1333 = vsub.f32 %v1331, %v1332
    %v1334 = vand.u32 %v1333, 4294901760
    %1335 = vmatpush1.msra.mxu0 %v1334
    %1336 = vmatprep.subr.mxu0 0.0
    %v1337 = vand.u32 %v95, 4294901760
    %v1338 = vsub.f32 %v95, %v1337
    %v1339 = vand.u32 %v1338, 4294901760
    %v1340 = vsub.f32 %v1338, %v1339
    %v1341 = vand.u32 %v1340, 4294901760
    %1342 = vmatpush1.msra.mxu0 %v1341
    %1343 = vmatprep.subr.mxu0 0.0
    %v1344 = vand.u32 %v96, 4294901760
    %v1345 = vsub.f32 %v96, %v1344
    %v1346 = vand.u32 %v1345, 4294901760
    %v1347 = vsub.f32 %v1345, %v1346
    %v1348 = vand.u32 %v1347, 4294901760
    %1349 = vmatpush1.msra.mxu0 %v1348
    %1350 = vmatprep.subr.mxu0 0.0
    %v1351 = vand.u32 %v97, 4294901760
    %v1352 = vsub.f32 %v97, %v1351
    %v1353 = vand.u32 %v1352, 4294901760
    %v1354 = vsub.f32 %v1352, %v1353
    %v1355 = vand.u32 %v1354, 4294901760
    %1356 = vmatpush1.msra.mxu0 %v1355
    %1357 = vmatprep.subr.mxu0 0.0
    %v1358 = vand.u32 %v98, 4294901760
    %v1359 = vsub.f32 %v98, %v1358
    %v1360 = vand.u32 %v1359, 4294901760
    %v1361 = vsub.f32 %v1359, %v1360
    %v1362 = vand.u32 %v1361, 4294901760
    %1363 = vmatpush1.msra.mxu0 %v1362
    %1364 = vmatprep.subr.mxu0 0.0
    %v1365 = vand.u32 %v99, 4294901760
    %v1366 = vsub.f32 %v99, %v1365
    %v1367 = vand.u32 %v1366, 4294901760
    %v1368 = vsub.f32 %v1366, %v1367
    %v1369 = vand.u32 %v1368, 4294901760
    %1370 = vmatpush1.msra.mxu0 %v1369
    %1371 = vmatprep.subr.mxu0 0.0
    %v1372 = vand.u32 %v100, 4294901760
    %v1373 = vsub.f32 %v100, %v1372
    %v1374 = vand.u32 %v1373, 4294901760
    %v1375 = vsub.f32 %v1373, %v1374
    %v1376 = vand.u32 %v1375, 4294901760
    %1377 = vmatpush1.msra.mxu0 %v1376
    %1378 = vmatprep.subr.mxu0 0.0
    %v1379 = vand.u32 %v101, 4294901760
    %v1380 = vsub.f32 %v101, %v1379
    %v1381 = vand.u32 %v1380, 4294901760
    %v1382 = vsub.f32 %v1380, %v1381
    %v1383 = vand.u32 %v1382, 4294901760
    %1384 = vmatpush1.msra.mxu0 %v1383
    %1385 = vmatprep.subr.mxu0 0.0
    %v1386 = vand.u32 %v102, 4294901760
    %v1387 = vsub.f32 %v102, %v1386
    %v1388 = vand.u32 %v1387, 4294901760
    %v1389 = vsub.f32 %v1387, %v1388
    %v1390 = vand.u32 %v1389, 4294901760
    %1391 = vmatpush1.msra.mxu0 %v1390
    %1392 = vmatprep.subr.mxu0 0.0
    %v1393 = vand.u32 %v103, 4294901760
    %v1394 = vsub.f32 %v103, %v1393
    %v1395 = vand.u32 %v1394, 4294901760
    %v1396 = vsub.f32 %v1394, %v1395
    %v1397 = vand.u32 %v1396, 4294901760
    %1398 = vmatpush1.msra.mxu0 %v1397
    %1399 = vmatprep.subr.mxu0 0.0
    %v1400 = vand.u32 %v104, 4294901760
    %v1401 = vsub.f32 %v104, %v1400
    %v1402 = vand.u32 %v1401, 4294901760
    %v1403 = vsub.f32 %v1401, %v1402
    %v1404 = vand.u32 %v1403, 4294901760
    %1405 = vmatpush1.msra.mxu0 %v1404
    %1406 = vmatprep.subr.mxu0 0.0
    %v1407 = vand.u32 %v105, 4294901760
    %v1408 = vsub.f32 %v105, %v1407
    %v1409 = vand.u32 %v1408, 4294901760
    %v1410 = vsub.f32 %v1408, %v1409
    %v1411 = vand.u32 %v1410, 4294901760
    %1412 = vmatpush1.msra.mxu0 %v1411
    %1413 = vmatprep.subr.mxu0 0.0
    %v1414 = vand.u32 %v106, 4294901760
    %v1415 = vsub.f32 %v106, %v1414
    %v1416 = vand.u32 %v1415, 4294901760
    %v1417 = vsub.f32 %v1415, %v1416
    %v1418 = vand.u32 %v1417, 4294901760
    %1419 = vmatpush1.msra.mxu0 %v1418
    %1420 = vmatprep.subr.mxu0 0.0
    %v1421 = vand.u32 %v107, 4294901760
    %v1422 = vsub.f32 %v107, %v1421
    %v1423 = vand.u32 %v1422, 4294901760
    %v1424 = vsub.f32 %v1422, %v1423
    %v1425 = vand.u32 %v1424, 4294901760
    %1426 = vmatpush1.msra.mxu0 %v1425
    %1427 = vmatprep.subr.mxu0 0.0
    %1428 = vmatpush1.msra.mxu0 0.0
    %1429 = vmatprep.subr.mxu0 0.0
    %1430 = vmatpush1.msra.mxu0 0.0
    %1431 = vmatprep.subr.mxu0 0.0
    %1432 = vmatpush1.msra.mxu0 0.0
    %1433 = vmatprep.subr.mxu0 0.0
    %1434 = vmatpush1.msra.mxu0 0.0
    %1435 = vmatprep.subr.mxu0 0.0
    %1436 = vmatpush1.msra.mxu0 0.0
    %1437 = vmatprep.subr.mxu0 0.0
    %1438 = vmatpush1.msra.mxu0 0.0
    %1439 = vmatprep.subr.mxu0 0.0
    %1440 = vmatpush1.msra.mxu0 0.0
    %1441 = vmatprep.subr.mxu0 0.0
    %1442 = vmatpush1.msra.mxu0 0.0
    %1443 = vmatprep.subr.mxu0 0.0
    %1444 = vmatpush1.msra.mxu0 0.0
    %1445 = vmatprep.subr.mxu0 0.0
    %1446 = vmatpush1.msra.mxu0 0.0
    %1447 = vmatprep.subr.mxu0 0.0
    %1448 = vmatpush1.msra.mxu0 0.0
    %1449 = vmatprep.subr.mxu0 0.0
    %1450 = vmatpush1.msra.mxu0 0.0
    %1451 = vmatprep.subr.mxu0 0.0
    %1452 = vmatpush1.msra.mxu0 0.0
    %1453 = vmatprep.subr.mxu0 0.0
    %1454 = vmatpush1.msra.mxu0 0.0
    %1455 = vmatprep.subr.mxu0 0.0
    %1456 = vmatpush1.msra.mxu0 0.0
    %1457 = vmatprep.subr.mxu0 0.0
    %1458 = vmatpush1.msra.mxu0 0.0
    %1459 = vmatprep.mubr.f32.mxu0 0.0
    %v1460 = vand.u32 %v1223, 4294901760
    %1461 = vmatmul.mubr.f32.gmra.mrb[0].mxu0 %v1460
    %v1462 = vpop.f32.mrb[0].mxu0
    %v1463 = vadd.f32 %v1312, %v1462
    %v1464 = vpop.f32.mrb[0].mxu0
    %1465 = vdwg.mxu0
    %1466 = vmatprep.subr.mxu0 0.0
    %v1467 = vand.u32 %v92, 4294901760
    %v1468 = vsub.f32 %v92, %v1467
    %1469 = vmatpush1.msra.mxu0 %v1468
    %1470 = vmatprep.subr.mxu0 0.0
    %v1471 = vand.u32 %v93, 4294901760
    %v1472 = vsub.f32 %v93, %v1471
    %1473 = vmatpush1.msra.mxu0 %v1472
    %1474 = vmatprep.subr.mxu0 0.0
    %v1475 = vand.u32 %v94, 4294901760
    %v1476 = vsub.f32 %v94, %v1475
    %1477 = vmatpush1.msra.mxu0 %v1476
    %1478 = vmatprep.subr.mxu0 0.0
    %v1479 = vand.u32 %v95, 4294901760
    %v1480 = vsub.f32 %v95, %v1479
    %1481 = vmatpush1.msra.mxu0 %v1480
    %1482 = vmatprep.subr.mxu0 0.0
    %v1483 = vand.u32 %v96, 4294901760
    %v1484 = vsub.f32 %v96, %v1483
    %1485 = vmatpush1.msra.mxu0 %v1484
    %1486 = vmatprep.subr.mxu0 0.0
    %v1487 = vand.u32 %v97, 4294901760
    %v1488 = vsub.f32 %v97, %v1487
    %1489 = vmatpush1.msra.mxu0 %v1488
    %1490 = vmatprep.subr.mxu0 0.0
    %v1491 = vand.u32 %v98, 4294901760
    %v1492 = vsub.f32 %v98, %v1491
    %1493 = vmatpush1.msra.mxu0 %v1492
    %1494 = vmatprep.subr.mxu0 0.0
    %v1495 = vand.u32 %v99, 4294901760
    %v1496 = vsub.f32 %v99, %v1495
    %1497 = vmatpush1.msra.mxu0 %v1496
    %1498 = vmatprep.subr.mxu0 0.0
    %v1499 = vand.u32 %v100, 4294901760
    %v1500 = vsub.f32 %v100, %v1499
    %1501 = vmatpush1.msra.mxu0 %v1500
    %1502 = vmatprep.subr.mxu0 0.0
    %v1503 = vand.u32 %v101, 4294901760
    %v1504 = vsub.f32 %v101, %v1503
    %1505 = vmatpush1.msra.mxu0 %v1504
    %1506 = vmatprep.subr.mxu0 0.0
    %v1507 = vand.u32 %v102, 4294901760
    %v1508 = vsub.f32 %v102, %v1507
    %1509 = vmatpush1.msra.mxu0 %v1508
    %1510 = vmatprep.subr.mxu0 0.0
    %v1511 = vand.u32 %v103, 4294901760
    %v1512 = vsub.f32 %v103, %v1511
    %1513 = vmatpush1.msra.mxu0 %v1512
    %1514 = vmatprep.subr.mxu0 0.0
    %v1515 = vand.u32 %v104, 4294901760
    %v1516 = vsub.f32 %v104, %v1515
    %1517 = vmatpush1.msra.mxu0 %v1516
    %1518 = vmatprep.subr.mxu0 0.0
    %v1519 = vand.u32 %v105, 4294901760
    %v1520 = vsub.f32 %v105, %v1519
    %1521 = vmatpush1.msra.mxu0 %v1520
    %1522 = vmatprep.subr.mxu0 0.0
    %v1523 = vand.u32 %v106, 4294901760
    %v1524 = vsub.f32 %v106, %v1523
    %1525 = vmatpush1.msra.mxu0 %v1524
    %1526 = vmatprep.subr.mxu0 0.0
    %v1527 = vand.u32 %v107, 4294901760
    %v1528 = vsub.f32 %v107, %v1527
    %1529 = vmatpush1.msra.mxu0 %v1528
    %1530 = vmatprep.subr.mxu0 0.0
    %1531 = vmatpush1.msra.mxu0 0.0
    %1532 = vmatprep.subr.mxu0 0.0
    %1533 = vmatpush1.msra.mxu0 0.0
    %1534 = vmatprep.subr.mxu0 0.0
    %1535 = vmatpush1.msra.mxu0 0.0
    %1536 = vmatprep.subr.mxu0 0.0
    %1537 = vmatpush1.msra.mxu0 0.0
    %1538 = vmatprep.subr.mxu0 0.0
    %1539 = vmatpush1.msra.mxu0 0.0
    %1540 = vmatprep.subr.mxu0 0.0
    %1541 = vmatpush1.msra.mxu0 0.0
    %1542 = vmatprep.subr.mxu0 0.0
    %1543 = vmatpush1.msra.mxu0 0.0
    %1544 = vmatprep.subr.mxu0 0.0
    %1545 = vmatpush1.msra.mxu0 0.0
    %1546 = vmatprep.subr.mxu0 0.0
    %1547 = vmatpush1.msra.mxu0 0.0
    %1548 = vmatprep.subr.mxu0 0.0
    %1549 = vmatpush1.msra.mxu0 0.0
    %1550 = vmatprep.subr.mxu0 0.0
    %1551 = vmatpush1.msra.mxu0 0.0
    %1552 = vmatprep.subr.mxu0 0.0
    %1553 = vmatpush1.msra.mxu0 0.0
    %1554 = vmatprep.subr.mxu0 0.0
    %1555 = vmatpush1.msra.mxu0 0.0
    %1556 = vmatprep.subr.mxu0 0.0
    %1557 = vmatpush1.msra.mxu0 0.0
    %1558 = vmatprep.subr.mxu0 0.0
    %1559 = vmatpush1.msra.mxu0 0.0
    %1560 = vmatprep.subr.mxu0 0.0
    %1561 = vmatpush1.msra.mxu0 0.0
    %1562 = vmatprep.mubr.f32.mxu0 0.0
    %v1563 = vand.u32 %v1223, 4294901760
    %v1564 = vsub.f32 %v1223, %v1563
    %1565 = vmatmul.mubr.f32.gmra.mrb[0].mxu0 %v1564
    %v1566 = vpop.f32.mrb[0].mxu0
    %v1567 = vadd.f32 %v1463, %v1566
    %v1568 = vpop.f32.mrb[0].mxu0
    %1569 = vdwg.mxu0
    %1570 = vmatprep.subr.mxu0 0.0
    %v1571 = vand.u32 %v92, 4294901760
    %1572 = vmatpush1.msra.mxu0 %v1571
    %1573 = vmatprep.subr.mxu0 0.0
    %v1574 = vand.u32 %v93, 4294901760
    %1575 = vmatpush1.msra.mxu0 %v1574
    %1576 = vmatprep.subr.mxu0 0.0
    %v1577 = vand.u32 %v94, 4294901760
    %1578 = vmatpush1.msra.mxu0 %v1577
    %1579 = vmatprep.subr.mxu0 0.0
    %v1580 = vand.u32 %v95, 4294901760
    %1581 = vmatpush1.msra.mxu0 %v1580
    %1582 = vmatprep.subr.mxu0 0.0
    %v1583 = vand.u32 %v96, 4294901760
    %1584 = vmatpush1.msra.mxu0 %v1583
    %1585 = vmatprep.subr.mxu0 0.0
    %v1586 = vand.u32 %v97, 4294901760
    %1587 = vmatpush1.msra.mxu0 %v1586
    %1588 = vmatprep.subr.mxu0 0.0
    %v1589 = vand.u32 %v98, 4294901760
    %1590 = vmatpush1.msra.mxu0 %v1589
    %1591 = vmatprep.subr.mxu0 0.0
    %v1592 = vand.u32 %v99, 4294901760
    %1593 = vmatpush1.msra.mxu0 %v1592
    %1594 = vmatprep.subr.mxu0 0.0
    %v1595 = vand.u32 %v100, 4294901760
    %1596 = vmatpush1.msra.mxu0 %v1595
    %1597 = vmatprep.subr.mxu0 0.0
    %v1598 = vand.u32 %v101, 4294901760
    %1599 = vmatpush1.msra.mxu0 %v1598
    %1600 = vmatprep.subr.mxu0 0.0
    %v1601 = vand.u32 %v102, 4294901760
    %1602 = vmatpush1.msra.mxu0 %v1601
    %1603 = vmatprep.subr.mxu0 0.0
    %v1604 = vand.u32 %v103, 4294901760
    %1605 = vmatpush1.msra.mxu0 %v1604
    %1606 = vmatprep.subr.mxu0 0.0
    %v1607 = vand.u32 %v104, 4294901760
    %1608 = vmatpush1.msra.mxu0 %v1607
    %1609 = vmatprep.subr.mxu0 0.0
    %v1610 = vand.u32 %v105, 4294901760
    %1611 = vmatpush1.msra.mxu0 %v1610
    %1612 = vmatprep.subr.mxu0 0.0
    %v1613 = vand.u32 %v106, 4294901760
    %1614 = vmatpush1.msra.mxu0 %v1613
    %1615 = vmatprep.subr.mxu0 0.0
    %v1616 = vand.u32 %v107, 4294901760
    %1617 = vmatpush1.msra.mxu0 %v1616
    %1618 = vmatprep.subr.mxu0 0.0
    %1619 = vmatpush1.msra.mxu0 0.0
    %1620 = vmatprep.subr.mxu0 0.0
    %1621 = vmatpush1.msra.mxu0 0.0
    %1622 = vmatprep.subr.mxu0 0.0
    %1623 = vmatpush1.msra.mxu0 0.0
    %1624 = vmatprep.subr.mxu0 0.0
    %1625 = vmatpush1.msra.mxu0 0.0
    %1626 = vmatprep.subr.mxu0 0.0
    %1627 = vmatpush1.msra.mxu0 0.0
    %1628 = vmatprep.subr.mxu0 0.0
    %1629 = vmatpush1.msra.mxu0 0.0
    %1630 = vmatprep.subr.mxu0 0.0
    %1631 = vmatpush1.msra.mxu0 0.0
    %1632 = vmatprep.subr.mxu0 0.0
    %1633 = vmatpush1.msra.mxu0 0.0
    %1634 = vmatprep.subr.mxu0 0.0
    %1635 = vmatpush1.msra.mxu0 0.0
    %1636 = vmatprep.subr.mxu0 0.0
    %1637 = vmatpush1.msra.mxu0 0.0
    %1638 = vmatprep.subr.mxu0 0.0
    %1639 = vmatpush1.msra.mxu0 0.0
    %1640 = vmatprep.subr.mxu0 0.0
    %1641 = vmatpush1.msra.mxu0 0.0
    %1642 = vmatprep.subr.mxu0 0.0
    %1643 = vmatpush1.msra.mxu0 0.0
    %1644 = vmatprep.subr.mxu0 0.0
    %1645 = vmatpush1.msra.mxu0 0.0
    %1646 = vmatprep.subr.mxu0 0.0
    %1647 = vmatpush1.msra.mxu0 0.0
    %1648 = vmatprep.subr.mxu0 0.0
    %1649 = vmatpush1.msra.mxu0 0.0
    %1650 = vmatprep.mubr.f32.mxu0 0.0
    %v1651 = vand.u32 %v1223, 4294901760
    %v1652 = vsub.f32 %v1223, %v1651
    %v1653 = vand.u32 %v1652, 4294901760
    %1654 = vmatmul.mubr.f32.gmra.mrb[0].mxu0 %v1653
    %v1655 = vpop.f32.mrb[0].mxu0
    %v1656 = vadd.f32 %v1567, %v1655
    %v1657 = vpop.f32.mrb[0].mxu0
    %1658 = vdwg.mxu0
    %1659 = vmatprep.subr.mxu0 0.0
    %v1660 = vand.u32 %v92, 4294901760
    %v1661 = vsub.f32 %v92, %v1660
    %v1662 = vand.u32 %v1661, 4294901760
    %1663 = vmatpush1.msra.mxu0 %v1662
    %1664 = vmatprep.subr.mxu0 0.0
    %v1665 = vand.u32 %v93, 4294901760
    %v1666 = vsub.f32 %v93, %v1665
    %v1667 = vand.u32 %v1666, 4294901760
    %1668 = vmatpush1.msra.mxu0 %v1667
    %1669 = vmatprep.subr.mxu0 0.0
    %v1670 = vand.u32 %v94, 4294901760
    %v1671 = vsub.f32 %v94, %v1670
    %v1672 = vand.u32 %v1671, 4294901760
    %1673 = vmatpush1.msra.mxu0 %v1672
    %1674 = vmatprep.subr.mxu0 0.0
    %v1675 = vand.u32 %v95, 4294901760
    %v1676 = vsub.f32 %v95, %v1675
    %v1677 = vand.u32 %v1676, 4294901760
    %1678 = vmatpush1.msra.mxu0 %v1677
    %1679 = vmatprep.subr.mxu0 0.0
    %v1680 = vand.u32 %v96, 4294901760
    %v1681 = vsub.f32 %v96, %v1680
    %v1682 = vand.u32 %v1681, 4294901760
    %1683 = vmatpush1.msra.mxu0 %v1682
    %1684 = vmatprep.subr.mxu0 0.0
    %v1685 = vand.u32 %v97, 4294901760
    %v1686 = vsub.f32 %v97, %v1685
    %v1687 = vand.u32 %v1686, 4294901760
    %1688 = vmatpush1.msra.mxu0 %v1687
    %1689 = vmatprep.subr.mxu0 0.0
    %v1690 = vand.u32 %v98, 4294901760
    %v1691 = vsub.f32 %v98, %v1690
    %v1692 = vand.u32 %v1691, 4294901760
    %1693 = vmatpush1.msra.mxu0 %v1692
    %1694 = vmatprep.subr.mxu0 0.0
    %v1695 = vand.u32 %v99, 4294901760
    %v1696 = vsub.f32 %v99, %v1695
    %v1697 = vand.u32 %v1696, 4294901760
    %1698 = vmatpush1.msra.mxu0 %v1697
    %1699 = vmatprep.subr.mxu0 0.0
    %v1700 = vand.u32 %v100, 4294901760
    %v1701 = vsub.f32 %v100, %v1700
    %v1702 = vand.u32 %v1701, 4294901760
    %1703 = vmatpush1.msra.mxu0 %v1702
    %1704 = vmatprep.subr.mxu0 0.0
    %v1705 = vand.u32 %v101, 4294901760
    %v1706 = vsub.f32 %v101, %v1705
    %v1707 = vand.u32 %v1706, 4294901760
    %1708 = vmatpush1.msra.mxu0 %v1707
    %1709 = vmatprep.subr.mxu0 0.0
    %v1710 = vand.u32 %v102, 4294901760
    %v1711 = vsub.f32 %v102, %v1710
    %v1712 = vand.u32 %v1711, 4294901760
    %1713 = vmatpush1.msra.mxu0 %v1712
    %1714 = vmatprep.subr.mxu0 0.0
    %v1715 = vand.u32 %v103, 4294901760
    %v1716 = vsub.f32 %v103, %v1715
    %v1717 = vand.u32 %v1716, 4294901760
    %1718 = vmatpush1.msra.mxu0 %v1717
    %1719 = vmatprep.subr.mxu0 0.0
    %v1720 = vand.u32 %v104, 4294901760
    %v1721 = vsub.f32 %v104, %v1720
    %v1722 = vand.u32 %v1721, 4294901760
    %1723 = vmatpush1.msra.mxu0 %v1722
    %1724 = vmatprep.subr.mxu0 0.0
    %v1725 = vand.u32 %v105, 4294901760
    %v1726 = vsub.f32 %v105, %v1725
    %v1727 = vand.u32 %v1726, 4294901760
    %1728 = vmatpush1.msra.mxu0 %v1727
    %1729 = vmatprep.subr.mxu0 0.0
    %v1730 = vand.u32 %v106, 4294901760
    %v1731 = vsub.f32 %v106, %v1730
    %v1732 = vand.u32 %v1731, 4294901760
    %1733 = vmatpush1.msra.mxu0 %v1732
    %1734 = vmatprep.subr.mxu0 0.0
    %v1735 = vand.u32 %v107, 4294901760
    %v1736 = vsub.f32 %v107, %v1735
    %v1737 = vand.u32 %v1736, 4294901760
    %1738 = vmatpush1.msra.mxu0 %v1737
    %1739 = vmatprep.subr.mxu0 0.0
    %1740 = vmatpush1.msra.mxu0 0.0
    %1741 = vmatprep.subr.mxu0 0.0
    %1742 = vmatpush1.msra.mxu0 0.0
    %1743 = vmatprep.subr.mxu0 0.0
    %1744 = vmatpush1.msra.mxu0 0.0
    %1745 = vmatprep.subr.mxu0 0.0
    %1746 = vmatpush1.msra.mxu0 0.0
    %1747 = vmatprep.subr.mxu0 0.0
    %1748 = vmatpush1.msra.mxu0 0.0
    %1749 = vmatprep.subr.mxu0 0.0
    %1750 = vmatpush1.msra.mxu0 0.0
    %1751 = vmatprep.subr.mxu0 0.0
    %1752 = vmatpush1.msra.mxu0 0.0
    %1753 = vmatprep.subr.mxu0 0.0
    %1754 = vmatpush1.msra.mxu0 0.0
    %1755 = vmatprep.subr.mxu0 0.0
    %1756 = vmatpush1.msra.mxu0 0.0
    %1757 = vmatprep.subr.mxu0 0.0
    %1758 = vmatpush1.msra.mxu0 0.0
    %1759 = vmatprep.subr.mxu0 0.0
    %1760 = vmatpush1.msra.mxu0 0.0
    %1761 = vmatprep.subr.mxu0 0.0
    %1762 = vmatpush1.msra.mxu0 0.0
    %1763 = vmatprep.subr.mxu0 0.0
    %1764 = vmatpush1.msra.mxu0 0.0
    %1765 = vmatprep.subr.mxu0 0.0
    %1766 = vmatpush1.msra.mxu0 0.0
    %1767 = vmatprep.subr.mxu0 0.0
    %1768 = vmatpush1.msra.mxu0 0.0
    %1769 = vmatprep.subr.mxu0 0.0
    %1770 = vmatpush1.msra.mxu0 0.0
    %1771 = vmatprep.mubr.f32.mxu0 0.0
    %v1772 = vand.u32 %v1223, 4294901760
    %1773 = vmatmul.mubr.f32.gmra.mrb[0].mxu0 %v1772
    %v1774 = vpop.f32.mrb[0].mxu0
    %v1775 = vadd.f32 %v1656, %v1774
    %v1776 = vpop.f32.mrb[0].mxu0
    %1777 = vdwg.mxu0
    %1778 = vmatprep.subr.mxu0 0.0
    %v1779 = vand.u32 %v92, 4294901760
    %1780 = vmatpush1.msra.mxu0 %v1779
    %1781 = vmatprep.subr.mxu0 0.0
    %v1782 = vand.u32 %v93, 4294901760
    %1783 = vmatpush1.msra.mxu0 %v1782
    %1784 = vmatprep.subr.mxu0 0.0
    %v1785 = vand.u32 %v94, 4294901760
    %1786 = vmatpush1.msra.mxu0 %v1785
    %1787 = vmatprep.subr.mxu0 0.0
    %v1788 = vand.u32 %v95, 4294901760
    %1789 = vmatpush1.msra.mxu0 %v1788
    %1790 = vmatprep.subr.mxu0 0.0
    %v1791 = vand.u32 %v96, 4294901760
    %1792 = vmatpush1.msra.mxu0 %v1791
    %1793 = vmatprep.subr.mxu0 0.0
    %v1794 = vand.u32 %v97, 4294901760
    %1795 = vmatpush1.msra.mxu0 %v1794
    %1796 = vmatprep.subr.mxu0 0.0
    %v1797 = vand.u32 %v98, 4294901760
    %1798 = vmatpush1.msra.mxu0 %v1797
    %1799 = vmatprep.subr.mxu0 0.0
    %v1800 = vand.u32 %v99, 4294901760
    %1801 = vmatpush1.msra.mxu0 %v1800
    %1802 = vmatprep.subr.mxu0 0.0
    %v1803 = vand.u32 %v100, 4294901760
    %1804 = vmatpush1.msra.mxu0 %v1803
    %1805 = vmatprep.subr.mxu0 0.0
    %v1806 = vand.u32 %v101, 4294901760
    %1807 = vmatpush1.msra.mxu0 %v1806
    %1808 = vmatprep.subr.mxu0 0.0
    %v1809 = vand.u32 %v102, 4294901760
    %1810 = vmatpush1.msra.mxu0 %v1809
    %1811 = vmatprep.subr.mxu0 0.0
    %v1812 = vand.u32 %v103, 4294901760
    %1813 = vmatpush1.msra.mxu0 %v1812
    %1814 = vmatprep.subr.mxu0 0.0
    %v1815 = vand.u32 %v104, 4294901760
    %1816 = vmatpush1.msra.mxu0 %v1815
    %1817 = vmatprep.subr.mxu0 0.0
    %v1818 = vand.u32 %v105, 4294901760
    %1819 = vmatpush1.msra.mxu0 %v1818
    %1820 = vmatprep.subr.mxu0 0.0
    %v1821 = vand.u32 %v106, 4294901760
    %1822 = vmatpush1.msra.mxu0 %v1821
    %1823 = vmatprep.subr.mxu0 0.0
    %v1824 = vand.u32 %v107, 4294901760
    %1825 = vmatpush1.msra.mxu0 %v1824
    %1826 = vmatprep.subr.mxu0 0.0
    %1827 = vmatpush1.msra.mxu0 0.0
    %1828 = vmatprep.subr.mxu0 0.0
    %1829 = vmatpush1.msra.mxu0 0.0
    %1830 = vmatprep.subr.mxu0 0.0
    %1831 = vmatpush1.msra.mxu0 0.0
    %1832 = vmatprep.subr.mxu0 0.0
    %1833 = vmatpush1.msra.mxu0 0.0
    %1834 = vmatprep.subr.mxu0 0.0
    %1835 = vmatpush1.msra.mxu0 0.0
    %1836 = vmatprep.subr.mxu0 0.0
    %1837 = vmatpush1.msra.mxu0 0.0
    %1838 = vmatprep.subr.mxu0 0.0
    %1839 = vmatpush1.msra.mxu0 0.0
    %1840 = vmatprep.subr.mxu0 0.0
    %1841 = vmatpush1.msra.mxu0 0.0
    %1842 = vmatprep.subr.mxu0 0.0
    %1843 = vmatpush1.msra.mxu0 0.0
    %1844 = vmatprep.subr.mxu0 0.0
    %1845 = vmatpush1.msra.mxu0 0.0
    %1846 = vmatprep.subr.mxu0 0.0
    %1847 = vmatpush1.msra.mxu0 0.0
    %1848 = vmatprep.subr.mxu0 0.0
    %1849 = vmatpush1.msra.mxu0 0.0
    %1850 = vmatprep.subr.mxu0 0.0
    %1851 = vmatpush1.msra.mxu0 0.0
    %1852 = vmatprep.subr.mxu0 0.0
    %1853 = vmatpush1.msra.mxu0 0.0
    %1854 = vmatprep.subr.mxu0 0.0
    %1855 = vmatpush1.msra.mxu0 0.0
    %1856 = vmatprep.subr.mxu0 0.0
    %1857 = vmatpush1.msra.mxu0 0.0
    %1858 = vmatprep.mubr.f32.mxu0 0.0
    %v1859 = vand.u32 %v1223, 4294901760
    %1860 = vmatmul.mubr.f32.gmra.mrb[0].mxu0 %v1859
    %v1861 = vpop.f32.mrb[0].mxu0
    %v1862 = vadd.f32 %v1775, %v1861
    %v1863 = vpop.f32.mrb[0].mxu0
    %1864 = vdwg.mxu0
    %v1865 = vlog2.pop %v749
    %v1866 = vmul.f32 %v1865, 0.6931472
    %v1867 = vadd.f32 %v88, %v1866
    %v1868 = vsub.f32 %v1862, %v1867
    %v1869 = vmul.f32 %v1868, 1.442695
    %v1870 = vpow.pop %v1869
    %v1871 = vsub.f32 1.0, %v1870
    %v1872 = vmul.f32 %v1871, %v1871
    %v1873 = vmul.f32 %v1872, %v1868
    %s1874 = sadd.s32 0, 0
    %s1875 = smul.u32 %s1874, 8
    %v1876 = vlaneseq
    %v1877 = vshrl.u32 %v1876, 7
    %v1878 = vstv %s1875
    %v1879 = vadd.s32 %v1878, %v1877
    %vm1880 = vcmp.ne.s32.totalorder %v86, 4294967295
    %vm1881 = vcmp.lt.s32.totalorder %v1879, 8
    %vm1882 = vmand %vm1880, %vm1881
    %v1883 = vsub.f32 0.0, %v1873
    %v1884 = vsel %vm1882, %v1883, 0.0
    %v1885 = vsel %vm1882, 1, 0
    %v1886 = vcvt.s32.f32 %v1885
    %v1887 = vld [vmem:[#allocation2] sm:$0x1]
    %v1888 = vsel %vm753, %v1884, 0.0
    %v1889 = vrot.slane %v1888, 4
    %v1890 = vadd.f32 %v1888, %v1889
    %v1891 = vrot.slane %v1890, 2
    %v1892 = vadd.f32 %v1890, %v1891
    %v1893 = vrot.slane %v1892, 1
    %v1894 = vadd.f32 %v1892, %v1893
    %v1895 = vsel %vm753, %v1894, 0.0
    %1896 = vadd.xlane.f32.xlu0 %v1895
    %v1897 = vpop.xlane.xlu0 %1896
    %v1898 = vadd.f32 %v1887, %v1897
    %vm1899 = vcmask 0
    %1900 = vst.msk [vmem:[#allocation2] sm:$0x1] %vm1899, %v1898
    %v1901 = vld [vmem:[#allocation4] sm:$0x1]
    %v1902 = vsel %vm753, %v1886, 0.0
    %v1903 = vrot.slane %v1902, 4
    %v1904 = vadd.f32 %v1902, %v1903
    %v1905 = vrot.slane %v1904, 2
    %v1906 = vadd.f32 %v1904, %v1905
    %v1907 = vrot.slane %v1906, 1
    %v1908 = vadd.f32 %v1906, %v1907
    %v1909 = vsel %vm753, %v1908, 0.0
    %1910 = vadd.xlane.f32.xlu0 %v1909
    %v1911 = vpop.xlane.xlu0 %1910
    %v1912 = vadd.f32 %v1901, %v1911
    %1913 = vst.msk [vmem:[#allocation4] sm:$0x1] %vm1899, %v1912
    // Predicated region
    $region26: #{tpu_custom_call.1} parent=1 // pred_check
      _
    $region27: #{tpu_custom_call.1} parent=1 // pred_check_branch
      %1915 = sbr.rel (0) target = $region29
    $region28: #{tpu_custom_call.1} parent=1 // pred_region
      %s1917 = ssub.s32 16, 16
      %1918 = vsyncadd [#allocation3], %s1917
      %s1920 = sshll.u32 [#allocation2], 4
      %s1921 = int_to_ptr.vmem [resolvable:$true] %s1920
      %1923 = dma.vmem_to_hbm [thread:$0]  %s1921, 16, %s5, [#allocation3]
    $region29: #{tpu_custom_call.1} parent=1 // pred_fallthru
      _
    // Predicated region
    $region30: #{tpu_custom_call.1} parent=1 // pred_check
      _
    $region31: #{tpu_custom_call.1} parent=1 // pred_check_branch
      %1925 = sbr.rel (0) target = $region33
    $region32: #{tpu_custom_call.1} parent=1 // pred_region
      %s1927 = ssub.s32 16, 16
      %1928 = vsyncadd [#allocation5], %s1927
      %s1930 = sshll.u32 [#allocation4], 4
      %s1931 = int_to_ptr.vmem [resolvable:$true] %s1930
      %1933 = dma.vmem_to_hbm [thread:$0]  %s1931, 16, %s6, [#allocation5]
    $region33: #{tpu_custom_call.1} parent=1 // pred_fallthru
      _
    // Predicated region
    $region34: #{tpu_custom_call.1} parent=1 // pred_check
      _
    $region35: #{tpu_custom_call.1} parent=1 // pred_check_branch
      %1935 = sbr.rel (0) target = $region37
    $region36: #{tpu_custom_call.1} parent=1 // pred_region
      %1936 = dma.done [#allocation3], 16
    $region37: #{tpu_custom_call.1} parent=1 // pred_fallthru
      _
    // Predicated region
    $region38: #{tpu_custom_call.1} parent=1 // pred_check
      _
    $region39: #{tpu_custom_call.1} parent=1 // pred_check_branch
      %1938 = sbr.rel (0) target = $region41
    $region40: #{tpu_custom_call.1} parent=1 // pred_region
      %1939 = dma.done [#allocation5], 16
    $region41: #{tpu_custom_call.1} parent=1 // pred_fallthru
      _
    %1940 = vsyncpa [#allocation3], 1
    %1941 = vsyncpa [#allocation5], 1

</llo_original>
